<compile_context>
chip_gen: v6e
topology: v6e:2x2x1
jax: 0.10.0
libtpu: 0.0.40
codegen_flags: <defaults>
</compile_context>

<pallas_src>
import functools

import jax
import jax.numpy as jnp
from jax import lax
from jax.experimental import pallas as pl
from jax.experimental.pallas import tpu as pltpu


def _round_up(n, m):
    return (n + m - 1) // m * m


def _make_kernel(tc, bb, t_total, dot_dtype, needs_mask, unroll):
    """Build the kernel with static chunk size / batch block / masking baked in."""

    def kernel(x_ref, h0_ref, wih_ref, whh_ref, bih_ref, bhh_ref,
               fcw_ref, fcb_ref, out_ref, hout_ref, xp_scr, h_scr):
        Hp = h_scr.shape[-1]
        t_blk = pl.program_id(1)
        n_blk = pl.num_programs(1)

        # ---- start of a batch block: load the carried hidden state ----
        @pl.when(t_blk == 0)
        def _init():
            h_scr[...] = h0_ref[...].astype(jnp.float32)

        # ---- per-chunk input projection: one (TC*bb, I) x (I, 3Hp) matmul ----
        xp = jnp.dot(x_ref[...].astype(dot_dtype), wih_ref[...],
                     preferred_element_type=jnp.float32) + bih_ref[...]
        xp_scr[...] = xp.astype(xp_scr.dtype)

        # ---- sequential recurrence over this chunk ----
        def step(t, h):
            off = pl.multiple_of(t * bb, bb)
            gx = xp_scr[pl.ds(off, bb), :].astype(jnp.float32)        # (bb, 3Hp)
            gh = jnp.dot(h.astype(dot_dtype), whh_ref[...],
                         preferred_element_type=jnp.float32) + bhh_ref[...]
            r = jax.nn.sigmoid(gx[:, 0 * Hp:1 * Hp] + gh[:, 0 * Hp:1 * Hp])
            z = jax.nn.sigmoid(gx[:, 1 * Hp:2 * Hp] + gh[:, 1 * Hp:2 * Hp])
            n = jnp.tanh(gx[:, 2 * Hp:3 * Hp] + r * gh[:, 2 * Hp:3 * Hp])
            h_new = (1.0 - z) * n + z * h
            if needs_mask:  # static: only when T was padded to a multiple of tc
                h_new = jnp.where(t_blk * tc + t < t_total, h_new, h)
            return h_new

        h_last = lax.fori_loop(0, tc, step, h_scr[...], unroll=unroll)
        h_scr[...] = h_last

        # ---- epilogue (once per batch block): final hidden + fc(relu(h_T)) ----
        @pl.when(t_blk == n_blk - 1)
        def _fin():
            hout_ref[...] = h_last.astype(hout_ref.dtype)
            relu = jnp.maximum(h_last, 0.0)
            out_ref[...] = (jnp.dot(relu.astype(dot_dtype), fcw_ref[...],
                                    preferred_element_type=jnp.float32)
                            + fcb_ref[...]).astype(out_ref.dtype)

    return kernel


def _pad_gate_cols(w, H, Hp):
    """(rows, 3H) -> (rows, 3Hp): gate g's real columns land at [g*Hp, g*Hp+H)."""
    rows = w.shape[0]
    out = jnp.zeros((rows, 3 * Hp), w.dtype)
    for g in range(3):
        out = out.at[:, g * Hp:g * Hp + H].set(w[:, g * H:(g + 1) * H])
    return out


def gru_net_forward(x, h0, params, *, t_chunk=None,
                    weight_dtype=jnp.float32, batch_blocks=1):
    """x: (B, T, I) f32 ; h0: (1, B, H) f32 -> (out (B*O, 1, 1), h (1, B, H)).

    weight_dtype=jnp.bfloat16 uses bf16 MXU operands (f32 accumulate / gate math).
    batch_blocks=2 adds a "parallel" batch grid axis (use on v7x's 2 TensorCores).
    """
    B, T, I = x.shape
    H = params["w_hh"].shape[0]
    O = params["fc_w"].shape[-1]

    Hp = _round_up(H, 128)                      # lane-dense hidden / per-gate width
    Op = _round_up(O, 128)                      # lane-dense fc output
    nb = int(batch_blocks)
    Bp = _round_up(B, 8 * nb)                   # sublane-full batch, split into nb blocks
    bb = Bp // nb                               # per-block batch rows (multiple of 8)

    xp_dtype = weight_dtype                     # bf16 scratch when bf16 weights
    # ---- default T chunk sized against a ~6 MiB x/xp budget ----
    if t_chunk is None:
        per_t = bb * (I * 4 * 2 + 3 * Hp * jnp.dtype(xp_dtype).itemsize)
        t_chunk = max(1, min(T, (6 * 1024 * 1024) // per_t))
    TC = int(min(t_chunk, T))
    n_tc = pl.cdiv(T, TC)
    Tp = n_tc * TC

    # ---- pad fused params to lane/sublane-dense layout (zeros in padding) ----
    wih_p = _pad_gate_cols(params["w_ih"], H, Hp).astype(weight_dtype)   # (I, 3Hp)
    whh_p = jnp.zeros((Hp, 3 * Hp), jnp.float32).at[:H].set(
        _pad_gate_cols(params["w_hh"], H, Hp)).astype(weight_dtype)      # (Hp, 3Hp)
    bih_p = _pad_gate_cols(params["b_ih"], H, Hp)                        # (1, 3Hp) f32
    bhh_p = _pad_gate_cols(params["b_hh"], H, Hp)                        # (1, 3Hp) f32
    fcw_p = jnp.zeros((Hp, Op), jnp.float32).at[:H, :O].set(
        params["fc_w"]).astype(weight_dtype)                             # (Hp, Op)
    fcb_p = jnp.zeros((1, Op), jnp.float32).at[:, :O].set(params["fc_b"])

    # ---- wrapper-side layout: (nb, n_tc, TC*bb, I), no in-kernel reshape ----
    x_tm = jnp.transpose(x, (1, 0, 2))                                   # (T, B, I)
    x_p = jnp.zeros((Tp, Bp, I), jnp.float32).at[:T, :B].set(x_tm)
    x_p = (x_p.reshape(n_tc, TC, nb, bb, I)
              .transpose(2, 0, 1, 3, 4)
              .reshape(nb, n_tc, TC * bb, I))
    h0_p = jnp.zeros((Bp, Hp), jnp.float32).at[:B, :H].set(h0[0])
    h0_p = h0_p.reshape(nb, bb, Hp)

    kernel = _make_kernel(TC, bb, T, weight_dtype,
                          needs_mask=(Tp != T), unroll=min(8, TC))

    wbytes = jnp.dtype(weight_dtype).itemsize
    est = (2 * (TC * bb * I * 4)                                  # x (double buffered)
           + 2 * (bb * Hp * 4)                                    # h0
           + 2 * ((I + Hp) * 3 * Hp * wbytes + 2 * 3 * Hp * 4
                  + Hp * Op * wbytes + Op * 4)                    # weights/biases
           + 2 * (bb * (Op + Hp) * 4)                             # outputs
           + TC * bb * 3 * Hp * jnp.dtype(xp_dtype).itemsize      # xp scratch
           + bb * Hp * 4)                                         # h carry
    vmem_limit = min(64 * 1024 * 1024, max(2 * est + (1 << 20), 16 * 1024 * 1024))

    flops = 2 * Tp * Bp * 3 * Hp * (I + Hp) + 2 * Bp * Hp * Op
    cost = pl.CostEstimate(
        flops=int(flops),
        transcendentals=int(Tp * Bp * 3 * Hp),
        bytes_accessed=int(x_p.size * 4 + (I + Hp) * 3 * Hp * wbytes
                           + Hp * Op * wbytes + Bp * (Op + 2 * Hp) * 4))

    full = lambda shp: pl.BlockSpec(shp, lambda b, t: (0, 0))
    out_p, h_p = pl.pallas_call(
        kernel,
        grid=(nb, n_tc),
        in_specs=[
            pl.BlockSpec((None, None, TC * bb, I), lambda b, t: (b, t, 0, 0)),
            pl.BlockSpec((None, bb, Hp), lambda b, t: (b, 0, 0)),
            full((I, 3 * Hp)),
            full((Hp, 3 * Hp)),
            full((1, 3 * Hp)),
            full((1, 3 * Hp)),
            full((Hp, Op)),
            full((1, Op)),
        ],
        out_specs=(
            pl.BlockSpec((None, bb, Op), lambda b, t: (b, 0, 0)),
            pl.BlockSpec((None, bb, Hp), lambda b, t: (b, 0, 0)),
        ),
        out_shape=(
            jax.ShapeDtypeStruct((nb, bb, Op), jnp.float32),
            jax.ShapeDtypeStruct((nb, bb, Hp), jnp.float32),
        ),
        scratch_shapes=[
            pltpu.VMEM((TC * bb, 3 * Hp), xp_dtype),    # per-chunk input projection
            pltpu.VMEM((bb, Hp), jnp.float32),          # h carried across T chunks
        ],
        input_output_aliases={1: 1},                    # h0 buffer reused for h out
        cost_estimate=cost,
        compiler_params=pltpu.CompilerParams(
            dimension_semantics=("parallel", "arbitrary"),
            vmem_limit_bytes=int(vmem_limit)),
    )(x_p, h0_p, wih_p, whh_p, bih_p, bhh_p, fcw_p, fcb_p)

    out = out_p.reshape(Bp, Op)[:B, :O].reshape(-1, 1, 1)   # matches out.view(-1,1,1)
    h = h_p.reshape(Bp, Hp)[:B, :H][None]                   # (1, B, H)
    return out, h


def init_params(key, input_size, hidden_size, output_dim):
    """Deterministic init, same uniform ranges PyTorch uses; fused gate layout."""
    ks = jax.random.split(key, 6)
    s = 1.0 / jnp.sqrt(hidden_size)
    u = lambda k, shape: jax.random.uniform(k, shape, jnp.float32, -s, s)
    return {
        # stored pre-transposed for x @ W; gate order (r, z, n) like PyTorch
        "w_ih": u(ks[0], (input_size, 3 * hidden_size)),
        "w_hh": u(ks[1], (hidden_size, 3 * hidden_size)),
        "b_ih": u(ks[2], (1, 3 * hidden_size)),
        "b_hh": u(ks[3], (1, 3 * hidden_size)),
        "fc_w": u(ks[4], (hidden_size, output_dim)),
        "fc_b": u(ks[5], (1, output_dim)),
    }


def gru_net_reference(x, h0, params):
    """Pure-JAX f32 reference (lax.scan) for correctness checking."""
    H = params["w_hh"].shape[0]

    def cell(h, x_t):
        gx = x_t @ params["w_ih"] + params["b_ih"]
        gh = h @ params["w_hh"] + params["b_hh"]
        r = jax.nn.sigmoid(gx[:, :H] + gh[:, :H])
        z = jax.nn.sigmoid(gx[:, H:2 * H] + gh[:, H:2 * H])
        n = jnp.tanh(gx[:, 2 * H:] + r * gh[:, 2 * H:])
        h_new = (1.0 - z) * n + z * h
        return h_new, h_new

    x_tm = jnp.transpose(x, (1, 0, 2))
    h_last, _ = lax.scan(cell, h0[0], x_tm)
    out = jnp.maximum(h_last, 0.0) @ params["fc_w"] + params["fc_b"]
    return out.reshape(-1, 1, 1), h_last[None]


if __name__ == "__main__":
    B, T, I, H, O = 2, 8, 16, 32, 1

    key = jax.random.PRNGKey(0)
    k_x, k_h, k_p = jax.random.split(key, 3)
    x = jax.random.normal(k_x, (B, T, I), jnp.float32)
    h0 = jax.random.normal(k_h, (1, B, H), jnp.float32)
    params = init_params(k_p, I, H, O)
    out_ref, h_ref = gru_net_reference(x, h0, params)

    # 1) f32 weights, single T chunk (tight parity with the f32 PyTorch module)
    out, h = gru_net_forward(x, h0, params)
    jax.block_until_ready((out, h))
    assert out.shape == (B * O, 1, 1) and h.shape == (1, B, H)
    assert jnp.allclose(out, out_ref, atol=1e-5, rtol=1e-5)
    assert jnp.allclose(h, h_ref, atol=1e-5, rtol=1e-5)

    # 2) chunked T (exercises h-carry across grid steps and the padded-tail mask)
    out_c, h_c = gru_net_forward(x, h0, params, t_chunk=3)
    jax.block_until_ready((out_c, h_c))
    assert jnp.allclose(out_c, out_ref, atol=1e-5, rtol=1e-5)
    assert jnp.allclose(h_c, h_ref, atol=1e-5, rtol=1e-5)

    # 3) bf16 MXU operands (perf mode) -- looser tolerance by construction
    out_b, h_b = gru_net_forward(x, h0, params, weight_dtype=jnp.bfloat16)
    jax.block_until_ready((out_b, h_b))
    assert jnp.allclose(out_b, out_ref, atol=5e-2, rtol=5e-2)
    assert jnp.allclose(h_b, h_ref, atol=5e-2, rtol=5e-2)

    # 4) two batch blocks on a "parallel" grid axis (v7x dual-TensorCore path)
    B2 = 20
    x2 = jax.random.normal(k_x, (B2, T, I), jnp.float32)
    h02 = jax.random.normal(k_h, (1, B2, H), jnp.float32)
    out2_ref, h2_ref = gru_net_reference(x2, h02, params)
    out2, h2 = gru_net_forward(x2, h02, params, batch_blocks=2)
    jax.block_until_ready((out2, h2))
    assert out2.shape == (B2 * O, 1, 1) and h2.shape == (1, B2, H)
    assert jnp.allclose(out2, out2_ref, atol=1e-5, rtol=1e-5)
    assert jnp.allclose(h2, h2_ref, atol=1e-5, rtol=1e-5)

    print("KERNEL_OK")
</pallas_src>

<mosaic_0001>
module attributes {stable_mosaic.version = 11 : i64} {
  func.func @kernel(%arg0: i32, %arg1: i32, %arg2: memref<1x1x64x16xf32, #tpu.memory_space<vmem>>, %arg3: memref<1x8x128xf32, #tpu.memory_space<vmem>>, %arg4: memref<16x384xf32, #tpu.memory_space<vmem>>, %arg5: memref<128x384xf32, #tpu.memory_space<vmem>>, %arg6: memref<1x384xf32, #tpu.memory_space<vmem>>, %arg7: memref<1x384xf32, #tpu.memory_space<vmem>>, %arg8: memref<128x128xf32, #tpu.memory_space<vmem>>, %arg9: memref<1x128xf32, #tpu.memory_space<vmem>>, %arg10: memref<1x8x128xf32, #tpu.memory_space<vmem>>, %arg11: memref<1x8x128xf32, #tpu.memory_space<vmem>>, %arg12: memref<64x384xf32, #tpu.memory_space<vmem>>, %arg13: memref<8x128xf32, #tpu.memory_space<vmem>>) attributes {dimension_semantics = [#tpu.dimension_semantics<parallel>, #tpu.dimension_semantics<arbitrary>], iteration_bounds = array<i64: 1, 1>, scalar_prefetch = 0 : i64, scratch_operands = 2 : i64, tpu.core_type = #tpu.core_type<tc>, window_params = [{transform_indices = @transform_0, window_bounds = array<i64: 1, 1, 64, 16>}, {transform_indices = @transform_1, window_bounds = array<i64: 1, 8, 128>}, {pipeline_mode = #tpu.pipeline_mode<synchronous>, transform_indices = @transform_2, window_bounds = array<i64: 16, 384>}, {pipeline_mode = #tpu.pipeline_mode<synchronous>, transform_indices = @transform_3, window_bounds = array<i64: 128, 384>}, {pipeline_mode = #tpu.pipeline_mode<synchronous>, transform_indices = @transform_4, window_bounds = array<i64: 1, 384>}, {pipeline_mode = #tpu.pipeline_mode<synchronous>, transform_indices = @transform_5, window_bounds = array<i64: 1, 384>}, {pipeline_mode = #tpu.pipeline_mode<synchronous>, transform_indices = @transform_6, window_bounds = array<i64: 128, 128>}, {pipeline_mode = #tpu.pipeline_mode<synchronous>, transform_indices = @transform_7, window_bounds = array<i64: 1, 128>}, {transform_indices = @transform_8, window_bounds = array<i64: 1, 8, 128>}, {transform_indices = @transform_9, window_bounds = array<i64: 1, 8, 128>}]} {
    %c0_i32 = arith.constant 0 : i32
    %0 = arith.cmpi eq, %arg1, %c0_i32 : i32
    %1 = arith.extui %0 : i1 to i32
    %c0_i32_0 = arith.constant 0 : i32
    %2 = arith.cmpi ne, %1, %c0_i32_0 : i32
    scf.if %2 {
      %c0_97 = arith.constant 0 : index
      %c0_98 = arith.constant 0 : index
      %c0_99 = arith.constant 0 : index
      %296 = vector.load %arg3[%c0_97, %c0_98, %c0_99] : memref<1x8x128xf32, #tpu.memory_space<vmem>>, vector<1x8x128xf32>
      %297 = vector.shape_cast %296 : vector<1x8x128xf32> to vector<8x128xf32>
      %c0_100 = arith.constant 0 : index
      %c0_101 = arith.constant 0 : index
      %298 = vector.load %arg13[%c0_100, %c0_101] : memref<8x128xf32, #tpu.memory_space<vmem>>, vector<8x128xf32>
      tpu.vector_store %arg13[%c0_100, %c0_101], %297 {strides = array<i32>} : memref<8x128xf32, #tpu.memory_space<vmem>>, vector<8x128xf32>,
    } else {
    }
    %c0 = arith.constant 0 : index
    %c0_1 = arith.constant 0 : index
    %c0_2 = arith.constant 0 : index
    %c0_3 = arith.constant 0 : index
    %3 = vector.load %arg2[%c0, %c0_1, %c0_2, %c0_3] : memref<1x1x64x16xf32, #tpu.memory_space<vmem>>, vector<1x1x64x16xf32>
    %4 = vector.shape_cast %3 : vector<1x1x64x16xf32> to vector<64x16xf32>
    %c0_4 = arith.constant 0 : index
    %c0_5 = arith.constant 0 : index
    %5 = vector.load %arg4[%c0_4, %c0_5] : memref<16x384xf32, #tpu.memory_space<vmem>>, vector<16x384xf32>
    %cst = arith.constant dense<0.000000e+00> : vector<64x384xf32>
    %6 = tpu.matmul %4, %5, %cst {dimension_numbers = #tpu.dot_dimension_numbers<[1], [0], [0], [1], [0, 0, 1, 1], [], []>} : vector<64x16xf32>, vector<16x384xf32>, vector<64x384xf32> -> vector<64x384xf32>
    %c0_6 = arith.constant 0 : index
    %c0_7 = arith.constant 0 : index
    %7 = vector.load %arg6[%c0_6, %c0_7] : memref<1x384xf32, #tpu.memory_space<vmem>>, vector<1x384xf32>
    %8 = vector.broadcast %7 : vector<1x384xf32> to vector<64x384xf32>
    %9 = arith.addf %6, %8 : vector<64x384xf32>
    %c0_8 = arith.constant 0 : index
    %c0_9 = arith.constant 0 : index
    %10 = vector.load %arg12[%c0_8, %c0_9] : memref<64x384xf32, #tpu.memory_space<vmem>>, vector<64x384xf32>
    tpu.vector_store %arg12[%c0_8, %c0_9], %9 {strides = array<i32>} : memref<64x384xf32, #tpu.memory_space<vmem>>, vector<64x384xf32>,
    %c0_10 = arith.constant 0 : index
    %c0_11 = arith.constant 0 : index
    %11 = vector.load %arg13[%c0_10, %c0_11] : memref<8x128xf32, #tpu.memory_space<vmem>>, vector<8x128xf32>
    %c0_i32_12 = arith.constant 0 : i32
    %c8_i32 = arith.constant 8 : i32
    %12 = arith.muli %c0_i32_12, %c8_i32 : i32
    %13 = tpu.assume_multiple %12, 8 : i32
    %14 = arith.index_cast %13 : i32 to index
    %c0_13 = arith.constant 0 : index
    %15 = vector.load %arg12[%14, %c0_13] : memref<64x384xf32, #tpu.memory_space<vmem>>, vector<8x384xf32>
    %c0_14 = arith.constant 0 : index
    %c0_15 = arith.constant 0 : index
    %16 = vector.load %arg5[%c0_14, %c0_15] : memref<128x384xf32, #tpu.memory_space<vmem>>, vector<128x384xf32>
    %cst_16 = arith.constant dense<0.000000e+00> : vector<8x384xf32>
    %17 = tpu.matmul %11, %16, %cst_16 {dimension_numbers = #tpu.dot_dimension_numbers<[1], [0], [0], [1], [0, 0, 1, 1], [], []>} : vector<8x128xf32>, vector<128x384xf32>, vector<8x384xf32> -> vector<8x384xf32>
    %c0_17 = arith.constant 0 : index
    %c0_18 = arith.constant 0 : index
    %18 = vector.load %arg7[%c0_17, %c0_18] : memref<1x384xf32, #tpu.memory_space<vmem>>, vector<1x384xf32>
    %19 = vector.broadcast %18 : vector<1x384xf32> to vector<8x384xf32>
    %20 = arith.addf %17, %19 : vector<8x384xf32>
    %21 = vector.extract_strided_slice %15 {offsets = [0, 0], sizes = [8, 128], strides = [1, 1]} : vector<8x384xf32> to vector<8x128xf32>
    %22 = vector.extract_strided_slice %20 {offsets = [0, 0], sizes = [8, 128], strides = [1, 1]} : vector<8x384xf32> to vector<8x128xf32>
    %23 = arith.addf %21, %22 : vector<8x128xf32>
    %24 = arith.negf %23 : vector<8x128xf32>
    %25 = math.exp %24 : vector<8x128xf32>
    %cst_19 = arith.constant 1.000000e+00 : f32
    %26 = vector.broadcast %cst_19 : f32 to vector<8x128xf32>
    %27 = arith.addf %26, %25 : vector<8x128xf32>
    %28 = arith.divf %26, %27 : vector<8x128xf32>
    %29 = vector.extract_strided_slice %15 {offsets = [0, 128], sizes = [8, 128], strides = [1, 1]} : vector<8x384xf32> to vector<8x128xf32>
    %30 = vector.extract_strided_slice %20 {offsets = [0, 128], sizes = [8, 128], strides = [1, 1]} : vector<8x384xf32> to vector<8x128xf32>
    %31 = arith.addf %29, %30 : vector<8x128xf32>
    %32 = arith.negf %31 : vector<8x128xf32>
    %33 = math.exp %32 : vector<8x128xf32>
    %cst_20 = arith.constant 1.000000e+00 : f32
    %34 = vector.broadcast %cst_20 : f32 to vector<8x128xf32>
    %35 = arith.addf %34, %33 : vector<8x128xf32>
    %36 = arith.divf %34, %35 : vector<8x128xf32>
    %37 = vector.extract_strided_slice %15 {offsets = [0, 256], sizes = [8, 128], strides = [1, 1]} : vector<8x384xf32> to vector<8x128xf32>
    %38 = vector.extract_strided_slice %20 {offsets = [0, 256], sizes = [8, 128], strides = [1, 1]} : vector<8x384xf32> to vector<8x128xf32>
    %39 = arith.mulf %28, %38 : vector<8x128xf32>
    %40 = arith.addf %37, %39 : vector<8x128xf32>
    %41 = math.tanh %40 : vector<8x128xf32>
    %cst_21 = arith.constant 1.000000e+00 : f32
    %42 = vector.broadcast %cst_21 : f32 to vector<8x128xf32>
    %43 = arith.subf %42, %36 : vector<8x128xf32>
    %44 = arith.mulf %43, %41 : vector<8x128xf32>
    %45 = arith.mulf %36, %11 : vector<8x128xf32>
    %46 = arith.addf %44, %45 : vector<8x128xf32>
    %c1_i32 = arith.constant 1 : i32
    %c8_i32_22 = arith.constant 8 : i32
    %47 = arith.muli %c1_i32, %c8_i32_22 : i32
    %48 = tpu.assume_multiple %47, 8 : i32
    %49 = arith.index_cast %48 : i32 to index
    %c0_23 = arith.constant 0 : index
    %50 = vector.load %arg12[%49, %c0_23] : memref<64x384xf32, #tpu.memory_space<vmem>>, vector<8x384xf32>
    %c0_24 = arith.constant 0 : index
    %c0_25 = arith.constant 0 : index
    %51 = vector.load %arg5[%c0_24, %c0_25] : memref<128x384xf32, #tpu.memory_space<vmem>>, vector<128x384xf32>
    %cst_26 = arith.constant dense<0.000000e+00> : vector<8x384xf32>
    %52 = tpu.matmul %46, %51, %cst_26 {dimension_numbers = #tpu.dot_dimension_numbers<[1], [0], [0], [1], [0, 0, 1, 1], [], []>} : vector<8x128xf32>, vector<128x384xf32>, vector<8x384xf32> -> vector<8x384xf32>
    %c0_27 = arith.constant 0 : index
    %c0_28 = arith.constant 0 : index
    %53 = vector.load %arg7[%c0_27, %c0_28] : memref<1x384xf32, #tpu.memory_space<vmem>>, vector<1x384xf32>
    %54 = vector.broadcast %53 : vector<1x384xf32> to vector<8x384xf32>
    %55 = arith.addf %52, %54 : vector<8x384xf32>
    %56 = vector.extract_strided_slice %50 {offsets = [0, 0], sizes = [8, 128], strides = [1, 1]} : vector<8x384xf32> to vector<8x128xf32>
    %57 = vector.extract_strided_slice %55 {offsets = [0, 0], sizes = [8, 128], strides = [1, 1]} : vector<8x384xf32> to vector<8x128xf32>
    %58 = arith.addf %56, %57 : vector<8x128xf32>
    %59 = arith.negf %58 : vector<8x128xf32>
    %60 = math.exp %59 : vector<8x128xf32>
    %cst_29 = arith.constant 1.000000e+00 : f32
    %61 = vector.broadcast %cst_29 : f32 to vector<8x128xf32>
    %62 = arith.addf %61, %60 : vector<8x128xf32>
    %63 = arith.divf %61, %62 : vector<8x128xf32>
    %64 = vector.extract_strided_slice %50 {offsets = [0, 128], sizes = [8, 128], strides = [1, 1]} : vector<8x384xf32> to vector<8x128xf32>
    %65 = vector.extract_strided_slice %55 {offsets = [0, 128], sizes = [8, 128], strides = [1, 1]} : vector<8x384xf32> to vector<8x128xf32>
    %66 = arith.addf %64, %65 : vector<8x128xf32>
    %67 = arith.negf %66 : vector<8x128xf32>
    %68 = math.exp %67 : vector<8x128xf32>
    %cst_30 = arith.constant 1.000000e+00 : f32
    %69 = vector.broadcast %cst_30 : f32 to vector<8x128xf32>
    %70 = arith.addf %69, %68 : vector<8x128xf32>
    %71 = arith.divf %69, %70 : vector<8x128xf32>
    %72 = vector.extract_strided_slice %50 {offsets = [0, 256], sizes = [8, 128], strides = [1, 1]} : vector<8x384xf32> to vector<8x128xf32>
    %73 = vector.extract_strided_slice %55 {offsets = [0, 256], sizes = [8, 128], strides = [1, 1]} : vector<8x384xf32> to vector<8x128xf32>
    %74 = arith.mulf %63, %73 : vector<8x128xf32>
    %75 = arith.addf %72, %74 : vector<8x128xf32>
    %76 = math.tanh %75 : vector<8x128xf32>
    %cst_31 = arith.constant 1.000000e+00 : f32
    %77 = vector.broadcast %cst_31 : f32 to vector<8x128xf32>
    %78 = arith.subf %77, %71 : vector<8x128xf32>
    %79 = arith.mulf %78, %76 : vector<8x128xf32>
    %80 = arith.mulf %71, %46 : vector<8x128xf32>
    %81 = arith.addf %79, %80 : vector<8x128xf32>
    %c2_i32 = arith.constant 2 : i32
    %c8_i32_32 = arith.constant 8 : i32
    %82 = arith.muli %c2_i32, %c8_i32_32 : i32
    %83 = tpu.assume_multiple %82, 8 : i32
    %84 = arith.index_cast %83 : i32 to index
    %c0_33 = arith.constant 0 : index
    %85 = vector.load %arg12[%84, %c0_33] : memref<64x384xf32, #tpu.memory_space<vmem>>, vector<8x384xf32>
    %c0_34 = arith.constant 0 : index
    %c0_35 = arith.constant 0 : index
    %86 = vector.load %arg5[%c0_34, %c0_35] : memref<128x384xf32, #tpu.memory_space<vmem>>, vector<128x384xf32>
    %cst_36 = arith.constant dense<0.000000e+00> : vector<8x384xf32>
    %87 = tpu.matmul %81, %86, %cst_36 {dimension_numbers = #tpu.dot_dimension_numbers<[1], [0], [0], [1], [0, 0, 1, 1], [], []>} : vector<8x128xf32>, vector<128x384xf32>, vector<8x384xf32> -> vector<8x384xf32>
    %c0_37 = arith.constant 0 : index
    %c0_38 = arith.constant 0 : index
    %88 = vector.load %arg7[%c0_37, %c0_38] : memref<1x384xf32, #tpu.memory_space<vmem>>, vector<1x384xf32>
    %89 = vector.broadcast %88 : vector<1x384xf32> to vector<8x384xf32>
    %90 = arith.addf %87, %89 : vector<8x384xf32>
    %91 = vector.extract_strided_slice %85 {offsets = [0, 0], sizes = [8, 128], strides = [1, 1]} : vector<8x384xf32> to vector<8x128xf32>
    %92 = vector.extract_strided_slice %90 {offsets = [0, 0], sizes = [8, 128], strides = [1, 1]} : vector<8x384xf32> to vector<8x128xf32>
    %93 = arith.addf %91, %92 : vector<8x128xf32>
    %94 = arith.negf %93 : vector<8x128xf32>
    %95 = math.exp %94 : vector<8x128xf32>
    %cst_39 = arith.constant 1.000000e+00 : f32
    %96 = vector.broadcast %cst_39 : f32 to vector<8x128xf32>
    %97 = arith.addf %96, %95 : vector<8x128xf32>
    %98 = arith.divf %96, %97 : vector<8x128xf32>
    %99 = vector.extract_strided_slice %85 {offsets = [0, 128], sizes = [8, 128], strides = [1, 1]} : vector<8x384xf32> to vector<8x128xf32>
    %100 = vector.extract_strided_slice %90 {offsets = [0, 128], sizes = [8, 128], strides = [1, 1]} : vector<8x384xf32> to vector<8x128xf32>
    %101 = arith.addf %99, %100 : vector<8x128xf32>
    %102 = arith.negf %101 : vector<8x128xf32>
    %103 = math.exp %102 : vector<8x128xf32>
    %cst_40 = arith.constant 1.000000e+00 : f32
    %104 = vector.broadcast %cst_40 : f32 to vector<8x128xf32>
    %105 = arith.addf %104, %103 : vector<8x128xf32>
    %106 = arith.divf %104, %105 : vector<8x128xf32>
    %107 = vector.extract_strided_slice %85 {offsets = [0, 256], sizes = [8, 128], strides = [1, 1]} : vector<8x384xf32> to vector<8x128xf32>
    %108 = vector.extract_strided_slice %90 {offsets = [0, 256], sizes = [8, 128], strides = [1, 1]} : vector<8x384xf32> to vector<8x128xf32>
    %109 = arith.mulf %98, %108 : vector<8x128xf32>
    %110 = arith.addf %107, %109 : vector<8x128xf32>
    %111 = math.tanh %110 : vector<8x128xf32>
    %cst_41 = arith.constant 1.000000e+00 : f32
    %112 = vector.broadcast %cst_41 : f32 to vector<8x128xf32>
    %113 = arith.subf %112, %106 : vector<8x128xf32>
    %114 = arith.mulf %113, %111 : vector<8x128xf32>
    %115 = arith.mulf %106, %81 : vector<8x128xf32>
    %116 = arith.addf %114, %115 : vector<8x128xf32>
    %c3_i32 = arith.constant 3 : i32
    %c8_i32_42 = arith.constant 8 : i32
    %117 = arith.muli %c3_i32, %c8_i32_42 : i32
    %118 = tpu.assume_multiple %117, 8 : i32
    %119 = arith.index_cast %118 : i32 to index
    %c0_43 = arith.constant 0 : index
    %120 = vector.load %arg12[%119, %c0_43] : memref<64x384xf32, #tpu.memory_space<vmem>>, vector<8x384xf32>
    %c0_44 = arith.constant 0 : index
    %c0_45 = arith.constant 0 : index
    %121 = vector.load %arg5[%c0_44, %c0_45] : memref<128x384xf32, #tpu.memory_space<vmem>>, vector<128x384xf32>
    %cst_46 = arith.constant dense<0.000000e+00> : vector<8x384xf32>
    %122 = tpu.matmul %116, %121, %cst_46 {dimension_numbers = #tpu.dot_dimension_numbers<[1], [0], [0], [1], [0, 0, 1, 1], [], []>} : vector<8x128xf32>, vector<128x384xf32>, vector<8x384xf32> -> vector<8x384xf32>
    %c0_47 = arith.constant 0 : index
    %c0_48 = arith.constant 0 : index
    %123 = vector.load %arg7[%c0_47, %c0_48] : memref<1x384xf32, #tpu.memory_space<vmem>>, vector<1x384xf32>
    %124 = vector.broadcast %123 : vector<1x384xf32> to vector<8x384xf32>
    %125 = arith.addf %122, %124 : vector<8x384xf32>
    %126 = vector.extract_strided_slice %120 {offsets = [0, 0], sizes = [8, 128], strides = [1, 1]} : vector<8x384xf32> to vector<8x128xf32>
    %127 = vector.extract_strided_slice %125 {offsets = [0, 0], sizes = [8, 128], strides = [1, 1]} : vector<8x384xf32> to vector<8x128xf32>
    %128 = arith.addf %126, %127 : vector<8x128xf32>
    %129 = arith.negf %128 : vector<8x128xf32>
    %130 = math.exp %129 : vector<8x128xf32>
    %cst_49 = arith.constant 1.000000e+00 : f32
    %131 = vector.broadcast %cst_49 : f32 to vector<8x128xf32>
    %132 = arith.addf %131, %130 : vector<8x128xf32>
    %133 = arith.divf %131, %132 : vector<8x128xf32>
    %134 = vector.extract_strided_slice %120 {offsets = [0, 128], sizes = [8, 128], strides = [1, 1]} : vector<8x384xf32> to vector<8x128xf32>
    %135 = vector.extract_strided_slice %125 {offsets = [0, 128], sizes = [8, 128], strides = [1, 1]} : vector<8x384xf32> to vector<8x128xf32>
    %136 = arith.addf %134, %135 : vector<8x128xf32>
    %137 = arith.negf %136 : vector<8x128xf32>
    %138 = math.exp %137 : vector<8x128xf32>
    %cst_50 = arith.constant 1.000000e+00 : f32
    %139 = vector.broadcast %cst_50 : f32 to vector<8x128xf32>
    %140 = arith.addf %139, %138 : vector<8x128xf32>
    %141 = arith.divf %139, %140 : vector<8x128xf32>
    %142 = vector.extract_strided_slice %120 {offsets = [0, 256], sizes = [8, 128], strides = [1, 1]} : vector<8x384xf32> to vector<8x128xf32>
    %143 = vector.extract_strided_slice %125 {offsets = [0, 256], sizes = [8, 128], strides = [1, 1]} : vector<8x384xf32> to vector<8x128xf32>
    %144 = arith.mulf %133, %143 : vector<8x128xf32>
    %145 = arith.addf %142, %144 : vector<8x128xf32>
    %146 = math.tanh %145 : vector<8x128xf32>
    %cst_51 = arith.constant 1.000000e+00 : f32
    %147 = vector.broadcast %cst_51 : f32 to vector<8x128xf32>
    %148 = arith.subf %147, %141 : vector<8x128xf32>
    %149 = arith.mulf %148, %146 : vector<8x128xf32>
    %150 = arith.mulf %141, %116 : vector<8x128xf32>
    %151 = arith.addf %149, %150 : vector<8x128xf32>
    %c4_i32 = arith.constant 4 : i32
    %c8_i32_52 = arith.constant 8 : i32
    %152 = arith.muli %c4_i32, %c8_i32_52 : i32
    %153 = tpu.assume_multiple %152, 8 : i32
    %154 = arith.index_cast %153 : i32 to index
    %c0_53 = arith.constant 0 : index
    %155 = vector.load %arg12[%154, %c0_53] : memref<64x384xf32, #tpu.memory_space<vmem>>, vector<8x384xf32>
    %c0_54 = arith.constant 0 : index
    %c0_55 = arith.constant 0 : index
    %156 = vector.load %arg5[%c0_54, %c0_55] : memref<128x384xf32, #tpu.memory_space<vmem>>, vector<128x384xf32>
    %cst_56 = arith.constant dense<0.000000e+00> : vector<8x384xf32>
    %157 = tpu.matmul %151, %156, %cst_56 {dimension_numbers = #tpu.dot_dimension_numbers<[1], [0], [0], [1], [0, 0, 1, 1], [], []>} : vector<8x128xf32>, vector<128x384xf32>, vector<8x384xf32> -> vector<8x384xf32>
    %c0_57 = arith.constant 0 : index
    %c0_58 = arith.constant 0 : index
    %158 = vector.load %arg7[%c0_57, %c0_58] : memref<1x384xf32, #tpu.memory_space<vmem>>, vector<1x384xf32>
    %159 = vector.broadcast %158 : vector<1x384xf32> to vector<8x384xf32>
    %160 = arith.addf %157, %159 : vector<8x384xf32>
    %161 = vector.extract_strided_slice %155 {offsets = [0, 0], sizes = [8, 128], strides = [1, 1]} : vector<8x384xf32> to vector<8x128xf32>
    %162 = vector.extract_strided_slice %160 {offsets = [0, 0], sizes = [8, 128], strides = [1, 1]} : vector<8x384xf32> to vector<8x128xf32>
    %163 = arith.addf %161, %162 : vector<8x128xf32>
    %164 = arith.negf %163 : vector<8x128xf32>
    %165 = math.exp %164 : vector<8x128xf32>
    %cst_59 = arith.constant 1.000000e+00 : f32
    %166 = vector.broadcast %cst_59 : f32 to vector<8x128xf32>
    %167 = arith.addf %166, %165 : vector<8x128xf32>
    %168 = arith.divf %166, %167 : vector<8x128xf32>
    %169 = vector.extract_strided_slice %155 {offsets = [0, 128], sizes = [8, 128], strides = [1, 1]} : vector<8x384xf32> to vector<8x128xf32>
    %170 = vector.extract_strided_slice %160 {offsets = [0, 128], sizes = [8, 128], strides = [1, 1]} : vector<8x384xf32> to vector<8x128xf32>
    %171 = arith.addf %169, %170 : vector<8x128xf32>
    %172 = arith.negf %171 : vector<8x128xf32>
    %173 = math.exp %172 : vector<8x128xf32>
    %cst_60 = arith.constant 1.000000e+00 : f32
    %174 = vector.broadcast %cst_60 : f32 to vector<8x128xf32>
    %175 = arith.addf %174, %173 : vector<8x128xf32>
    %176 = arith.divf %174, %175 : vector<8x128xf32>
    %177 = vector.extract_strided_slice %155 {offsets = [0, 256], sizes = [8, 128], strides = [1, 1]} : vector<8x384xf32> to vector<8x128xf32>
    %178 = vector.extract_strided_slice %160 {offsets = [0, 256], sizes = [8, 128], strides = [1, 1]} : vector<8x384xf32> to vector<8x128xf32>
    %179 = arith.mulf %168, %178 : vector<8x128xf32>
    %180 = arith.addf %177, %179 : vector<8x128xf32>
    %181 = math.tanh %180 : vector<8x128xf32>
    %cst_61 = arith.constant 1.000000e+00 : f32
    %182 = vector.broadcast %cst_61 : f32 to vector<8x128xf32>
    %183 = arith.subf %182, %176 : vector<8x128xf32>
    %184 = arith.mulf %183, %181 : vector<8x128xf32>
    %185 = arith.mulf %176, %151 : vector<8x128xf32>
    %186 = arith.addf %184, %185 : vector<8x128xf32>
    %c5_i32 = arith.constant 5 : i32
    %c8_i32_62 = arith.constant 8 : i32
    %187 = arith.muli %c5_i32, %c8_i32_62 : i32
    %188 = tpu.assume_multiple %187, 8 : i32
    %189 = arith.index_cast %188 : i32 to index
    %c0_63 = arith.constant 0 : index
    %190 = vector.load %arg12[%189, %c0_63] : memref<64x384xf32, #tpu.memory_space<vmem>>, vector<8x384xf32>
    %c0_64 = arith.constant 0 : index
    %c0_65 = arith.constant 0 : index
    %191 = vector.load %arg5[%c0_64, %c0_65] : memref<128x384xf32, #tpu.memory_space<vmem>>, vector<128x384xf32>
    %cst_66 = arith.constant dense<0.000000e+00> : vector<8x384xf32>
    %192 = tpu.matmul %186, %191, %cst_66 {dimension_numbers = #tpu.dot_dimension_numbers<[1], [0], [0], [1], [0, 0, 1, 1], [], []>} : vector<8x128xf32>, vector<128x384xf32>, vector<8x384xf32> -> vector<8x384xf32>
    %c0_67 = arith.constant 0 : index
    %c0_68 = arith.constant 0 : index
    %193 = vector.load %arg7[%c0_67, %c0_68] : memref<1x384xf32, #tpu.memory_space<vmem>>, vector<1x384xf32>
    %194 = vector.broadcast %193 : vector<1x384xf32> to vector<8x384xf32>
    %195 = arith.addf %192, %194 : vector<8x384xf32>
    %196 = vector.extract_strided_slice %190 {offsets = [0, 0], sizes = [8, 128], strides = [1, 1]} : vector<8x384xf32> to vector<8x128xf32>
    %197 = vector.extract_strided_slice %195 {offsets = [0, 0], sizes = [8, 128], strides = [1, 1]} : vector<8x384xf32> to vector<8x128xf32>
    %198 = arith.addf %196, %197 : vector<8x128xf32>
    %199 = arith.negf %198 : vector<8x128xf32>
    %200 = math.exp %199 : vector<8x128xf32>
    %cst_69 = arith.constant 1.000000e+00 : f32
    %201 = vector.broadcast %cst_69 : f32 to vector<8x128xf32>
    %202 = arith.addf %201, %200 : vector<8x128xf32>
    %203 = arith.divf %201, %202 : vector<8x128xf32>
    %204 = vector.extract_strided_slice %190 {offsets = [0, 128], sizes = [8, 128], strides = [1, 1]} : vector<8x384xf32> to vector<8x128xf32>
    %205 = vector.extract_strided_slice %195 {offsets = [0, 128], sizes = [8, 128], strides = [1, 1]} : vector<8x384xf32> to vector<8x128xf32>
    %206 = arith.addf %204, %205 : vector<8x128xf32>
    %207 = arith.negf %206 : vector<8x128xf32>
    %208 = math.exp %207 : vector<8x128xf32>
    %cst_70 = arith.constant 1.000000e+00 : f32
    %209 = vector.broadcast %cst_70 : f32 to vector<8x128xf32>
    %210 = arith.addf %209, %208 : vector<8x128xf32>
    %211 = arith.divf %209, %210 : vector<8x128xf32>
    %212 = vector.extract_strided_slice %190 {offsets = [0, 256], sizes = [8, 128], strides = [1, 1]} : vector<8x384xf32> to vector<8x128xf32>
    %213 = vector.extract_strided_slice %195 {offsets = [0, 256], sizes = [8, 128], strides = [1, 1]} : vector<8x384xf32> to vector<8x128xf32>
    %214 = arith.mulf %203, %213 : vector<8x128xf32>
    %215 = arith.addf %212, %214 : vector<8x128xf32>
    %216 = math.tanh %215 : vector<8x128xf32>
    %cst_71 = arith.constant 1.000000e+00 : f32
    %217 = vector.broadcast %cst_71 : f32 to vector<8x128xf32>
    %218 = arith.subf %217, %211 : vector<8x128xf32>
    %219 = arith.mulf %218, %216 : vector<8x128xf32>
    %220 = arith.mulf %211, %186 : vector<8x128xf32>
    %221 = arith.addf %219, %220 : vector<8x128xf32>
    %c6_i32 = arith.constant 6 : i32
    %c8_i32_72 = arith.constant 8 : i32
    %222 = arith.muli %c6_i32, %c8_i32_72 : i32
    %223 = tpu.assume_multiple %222, 8 : i32
    %224 = arith.index_cast %223 : i32 to index
    %c0_73 = arith.constant 0 : index
    %225 = vector.load %arg12[%224, %c0_73] : memref<64x384xf32, #tpu.memory_space<vmem>>, vector<8x384xf32>
    %c0_74 = arith.constant 0 : index
    %c0_75 = arith.constant 0 : index
    %226 = vector.load %arg5[%c0_74, %c0_75] : memref<128x384xf32, #tpu.memory_space<vmem>>, vector<128x384xf32>
    %cst_76 = arith.constant dense<0.000000e+00> : vector<8x384xf32>
    %227 = tpu.matmul %221, %226, %cst_76 {dimension_numbers = #tpu.dot_dimension_numbers<[1], [0], [0], [1], [0, 0, 1, 1], [], []>} : vector<8x128xf32>, vector<128x384xf32>, vector<8x384xf32> -> vector<8x384xf32>
    %c0_77 = arith.constant 0 : index
    %c0_78 = arith.constant 0 : index
    %228 = vector.load %arg7[%c0_77, %c0_78] : memref<1x384xf32, #tpu.memory_space<vmem>>, vector<1x384xf32>
    %229 = vector.broadcast %228 : vector<1x384xf32> to vector<8x384xf32>
    %230 = arith.addf %227, %229 : vector<8x384xf32>
    %231 = vector.extract_strided_slice %225 {offsets = [0, 0], sizes = [8, 128], strides = [1, 1]} : vector<8x384xf32> to vector<8x128xf32>
    %232 = vector.extract_strided_slice %230 {offsets = [0, 0], sizes = [8, 128], strides = [1, 1]} : vector<8x384xf32> to vector<8x128xf32>
    %233 = arith.addf %231, %232 : vector<8x128xf32>
    %234 = arith.negf %233 : vector<8x128xf32>
    %235 = math.exp %234 : vector<8x128xf32>
    %cst_79 = arith.constant 1.000000e+00 : f32
    %236 = vector.broadcast %cst_79 : f32 to vector<8x128xf32>
    %237 = arith.addf %236, %235 : vector<8x128xf32>
    %238 = arith.divf %236, %237 : vector<8x128xf32>
    %239 = vector.extract_strided_slice %225 {offsets = [0, 128], sizes = [8, 128], strides = [1, 1]} : vector<8x384xf32> to vector<8x128xf32>
    %240 = vector.extract_strided_slice %230 {offsets = [0, 128], sizes = [8, 128], strides = [1, 1]} : vector<8x384xf32> to vector<8x128xf32>
    %241 = arith.addf %239, %240 : vector<8x128xf32>
    %242 = arith.negf %241 : vector<8x128xf32>
    %243 = math.exp %242 : vector<8x128xf32>
    %cst_80 = arith.constant 1.000000e+00 : f32
    %244 = vector.broadcast %cst_80 : f32 to vector<8x128xf32>
    %245 = arith.addf %244, %243 : vector<8x128xf32>
    %246 = arith.divf %244, %245 : vector<8x128xf32>
    %247 = vector.extract_strided_slice %225 {offsets = [0, 256], sizes = [8, 128], strides = [1, 1]} : vector<8x384xf32> to vector<8x128xf32>
    %248 = vector.extract_strided_slice %230 {offsets = [0, 256], sizes = [8, 128], strides = [1, 1]} : vector<8x384xf32> to vector<8x128xf32>
    %249 = arith.mulf %238, %248 : vector<8x128xf32>
    %250 = arith.addf %247, %249 : vector<8x128xf32>
    %251 = math.tanh %250 : vector<8x128xf32>
    %cst_81 = arith.constant 1.000000e+00 : f32
    %252 = vector.broadcast %cst_81 : f32 to vector<8x128xf32>
    %253 = arith.subf %252, %246 : vector<8x128xf32>
    %254 = arith.mulf %253, %251 : vector<8x128xf32>
    %255 = arith.mulf %246, %221 : vector<8x128xf32>
    %256 = arith.addf %254, %255 : vector<8x128xf32>
    %c7_i32 = arith.constant 7 : i32
    %c8_i32_82 = arith.constant 8 : i32
    %257 = arith.muli %c7_i32, %c8_i32_82 : i32
    %258 = tpu.assume_multiple %257, 8 : i32
    %259 = arith.index_cast %258 : i32 to index
    %c0_83 = arith.constant 0 : index
    %260 = vector.load %arg12[%259, %c0_83] : memref<64x384xf32, #tpu.memory_space<vmem>>, vector<8x384xf32>
    %c0_84 = arith.constant 0 : index
    %c0_85 = arith.constant 0 : index
    %261 = vector.load %arg5[%c0_84, %c0_85] : memref<128x384xf32, #tpu.memory_space<vmem>>, vector<128x384xf32>
    %cst_86 = arith.constant dense<0.000000e+00> : vector<8x384xf32>
    %262 = tpu.matmul %256, %261, %cst_86 {dimension_numbers = #tpu.dot_dimension_numbers<[1], [0], [0], [1], [0, 0, 1, 1], [], []>} : vector<8x128xf32>, vector<128x384xf32>, vector<8x384xf32> -> vector<8x384xf32>
    %c0_87 = arith.constant 0 : index
    %c0_88 = arith.constant 0 : index
    %263 = vector.load %arg7[%c0_87, %c0_88] : memref<1x384xf32, #tpu.memory_space<vmem>>, vector<1x384xf32>
    %264 = vector.broadcast %263 : vector<1x384xf32> to vector<8x384xf32>
    %265 = arith.addf %262, %264 : vector<8x384xf32>
    %266 = vector.extract_strided_slice %260 {offsets = [0, 0], sizes = [8, 128], strides = [1, 1]} : vector<8x384xf32> to vector<8x128xf32>
    %267 = vector.extract_strided_slice %265 {offsets = [0, 0], sizes = [8, 128], strides = [1, 1]} : vector<8x384xf32> to vector<8x128xf32>
    %268 = arith.addf %266, %267 : vector<8x128xf32>
    %269 = arith.negf %268 : vector<8x128xf32>
    %270 = math.exp %269 : vector<8x128xf32>
    %cst_89 = arith.constant 1.000000e+00 : f32
    %271 = vector.broadcast %cst_89 : f32 to vector<8x128xf32>
    %272 = arith.addf %271, %270 : vector<8x128xf32>
    %273 = arith.divf %271, %272 : vector<8x128xf32>
    %274 = vector.extract_strided_slice %260 {offsets = [0, 128], sizes = [8, 128], strides = [1, 1]} : vector<8x384xf32> to vector<8x128xf32>
    %275 = vector.extract_strided_slice %265 {offsets = [0, 128], sizes = [8, 128], strides = [1, 1]} : vector<8x384xf32> to vector<8x128xf32>
    %276 = arith.addf %274, %275 : vector<8x128xf32>
    %277 = arith.negf %276 : vector<8x128xf32>
    %278 = math.exp %277 : vector<8x128xf32>
    %cst_90 = arith.constant 1.000000e+00 : f32
    %279 = vector.broadcast %cst_90 : f32 to vector<8x128xf32>
    %280 = arith.addf %279, %278 : vector<8x128xf32>
    %281 = arith.divf %279, %280 : vector<8x128xf32>
    %282 = vector.extract_strided_slice %260 {offsets = [0, 256], sizes = [8, 128], strides = [1, 1]} : vector<8x384xf32> to vector<8x128xf32>
    %283 = vector.extract_strided_slice %265 {offsets = [0, 256], sizes = [8, 128], strides = [1, 1]} : vector<8x384xf32> to vector<8x128xf32>
    %284 = arith.mulf %273, %283 : vector<8x128xf32>
    %285 = arith.addf %282, %284 : vector<8x128xf32>
    %286 = math.tanh %285 : vector<8x128xf32>
    %cst_91 = arith.constant 1.000000e+00 : f32
    %287 = vector.broadcast %cst_91 : f32 to vector<8x128xf32>
    %288 = arith.subf %287, %281 : vector<8x128xf32>
    %289 = arith.mulf %288, %286 : vector<8x128xf32>
    %290 = arith.mulf %281, %256 : vector<8x128xf32>
    %291 = arith.addf %289, %290 : vector<8x128xf32>
    %c8_i32_92 = arith.constant 8 : i32
    %c0_93 = arith.constant 0 : index
    %c0_94 = arith.constant 0 : index
    %292 = vector.load %arg13[%c0_93, %c0_94] : memref<8x128xf32, #tpu.memory_space<vmem>>, vector<8x128xf32>
    tpu.vector_store %arg13[%c0_93, %c0_94], %291 {strides = array<i32>} : memref<8x128xf32, #tpu.memory_space<vmem>>, vector<8x128xf32>,
    %c0_i32_95 = arith.constant 0 : i32
    %293 = arith.cmpi eq, %arg1, %c0_i32_95 : i32
    %294 = arith.extui %293 : i1 to i32
    %c0_i32_96 = arith.constant 0 : i32
    %295 = arith.cmpi ne, %294, %c0_i32_96 : i32
    scf.if %295 {
      %c0_97 = arith.constant 0 : index
      %c0_98 = arith.constant 0 : index
      %c0_99 = arith.constant 0 : index
      %296 = vector.load %arg11[%c0_97, %c0_98, %c0_99] : memref<1x8x128xf32, #tpu.memory_space<vmem>>, vector<1x8x128xf32>
      %297 = vector.shape_cast %296 : vector<1x8x128xf32> to vector<8x128xf32>
      %298 = vector.shape_cast %291 : vector<8x128xf32> to vector<1x8x128xf32>
      tpu.vector_store %arg11[%c0_97, %c0_98, %c0_99], %298 {strides = array<i32>} : memref<1x8x128xf32, #tpu.memory_space<vmem>>, vector<1x8x128xf32>,
      %cst_100 = arith.constant 0.000000e+00 : f32
      %299 = vector.broadcast %cst_100 : f32 to vector<8x128xf32>
      %300 = arith.maximumf %291, %299 : vector<8x128xf32>
      %c0_101 = arith.constant 0 : index
      %c0_102 = arith.constant 0 : index
      %301 = vector.load %arg8[%c0_101, %c0_102] : memref<128x128xf32, #tpu.memory_space<vmem>>, vector<128x128xf32>
      %cst_103 = arith.constant dense<0.000000e+00> : vector<8x128xf32>
      %302 = tpu.matmul %300, %301, %cst_103 {dimension_numbers = #tpu.dot_dimension_numbers<[1], [0], [0], [1], [0, 0, 1, 1], [], []>} : vector<8x128xf32>, vector<128x128xf32>, vector<8x128xf32> -> vector<8x128xf32>
      %c0_104 = arith.constant 0 : index
      %c0_105 = arith.constant 0 : index
      %303 = vector.load %arg9[%c0_104, %c0_105] : memref<1x128xf32, #tpu.memory_space<vmem>>, vector<1x128xf32>
      %304 = vector.broadcast %303 : vector<1x128xf32> to vector<8x128xf32>
      %305 = arith.addf %302, %304 : vector<8x128xf32>
      %c0_106 = arith.constant 0 : index
      %c0_107 = arith.constant 0 : index
      %c0_108 = arith.constant 0 : index
      %306 = vector.load %arg10[%c0_106, %c0_107, %c0_108] : memref<1x8x128xf32, #tpu.memory_space<vmem>>, vector<1x8x128xf32>
      %307 = vector.shape_cast %306 : vector<1x8x128xf32> to vector<8x128xf32>
      %308 = vector.shape_cast %305 : vector<8x128xf32> to vector<1x8x128xf32>
      tpu.vector_store %arg10[%c0_106, %c0_107, %c0_108], %308 {strides = array<i32>} : memref<1x8x128xf32, #tpu.memory_space<vmem>>, vector<1x8x128xf32>,
    } else {
    }
    return
  }
  func.func @transform_0(%arg0: i32, %arg1: i32) -> (i32, i32, i32, i32) {
    %c0_i32 = arith.constant 0 : i32
    %c0_i32_0 = arith.constant 0 : i32
    %c0_i32_1 = arith.constant 0 : i32
    return %arg0, %arg1, %c0_i32, %c0_i32_0 : i32, i32, i32, i32
  }
  func.func @transform_1(%arg0: i32, %arg1: i32) -> (i32, i32, i32) {
    %c0_i32 = arith.constant 0 : i32
    %c0_i32_0 = arith.constant 0 : i32
    %c0_i32_1 = arith.constant 0 : i32
    return %arg0, %c0_i32, %c0_i32_0 : i32, i32, i32
  }
  func.func @transform_2(%arg0: i32, %arg1: i32) -> (i32, i32) {
    %c0_i32 = arith.constant 0 : i32
    %c0_i32_0 = arith.constant 0 : i32
    %c0_i32_1 = arith.constant 0 : i32
    return %c0_i32, %c0_i32_0 : i32, i32
  }
  func.func @transform_3(%arg0: i32, %arg1: i32) -> (i32, i32) {
    %c0_i32 = arith.constant 0 : i32
    %c0_i32_0 = arith.constant 0 : i32
    %c0_i32_1 = arith.constant 0 : i32
    return %c0_i32, %c0_i32_0 : i32, i32
  }
  func.func @transform_4(%arg0: i32, %arg1: i32) -> (i32, i32) {
    %c0_i32 = arith.constant 0 : i32
    %c0_i32_0 = arith.constant 0 : i32
    %c0_i32_1 = arith.constant 0 : i32
    return %c0_i32, %c0_i32_0 : i32, i32
  }
  func.func @transform_5(%arg0: i32, %arg1: i32) -> (i32, i32) {
    %c0_i32 = arith.constant 0 : i32
    %c0_i32_0 = arith.constant 0 : i32
    %c0_i32_1 = arith.constant 0 : i32
    return %c0_i32, %c0_i32_0 : i32, i32
  }
  func.func @transform_6(%arg0: i32, %arg1: i32) -> (i32, i32) {
    %c0_i32 = arith.constant 0 : i32
    %c0_i32_0 = arith.constant 0 : i32
    %c0_i32_1 = arith.constant 0 : i32
    return %c0_i32, %c0_i32_0 : i32, i32
  }
  func.func @transform_7(%arg0: i32, %arg1: i32) -> (i32, i32) {
    %c0_i32 = arith.constant 0 : i32
    %c0_i32_0 = arith.constant 0 : i32
    %c0_i32_1 = arith.constant 0 : i32
    return %c0_i32, %c0_i32_0 : i32, i32
  }
  func.func @transform_8(%arg0: i32, %arg1: i32) -> (i32, i32, i32) {
    %c0_i32 = arith.constant 0 : i32
    %c0_i32_0 = arith.constant 0 : i32
    %c0_i32_1 = arith.constant 0 : i32
    return %arg0, %c0_i32, %c0_i32_0 : i32, i32, i32
  }
  func.func @transform_9(%arg0: i32, %arg1: i32) -> (i32, i32, i32) {
    %c0_i32 = arith.constant 0 : i32
    %c0_i32_0 = arith.constant 0 : i32
    %c0_i32_1 = arith.constant 0 : i32
    return %arg0, %c0_i32, %c0_i32_0 : i32, i32, i32
  }
}

</mosaic_0001>

<llo_original>
// kernel: tpu_custom_call.1
$region0: #{tpu_custom_call.1}
  #allocation0 [shape = 'u32[]', space=smem, size = 0x4, offset = 0x4, fixed_abs, tag = 'smem constant byte address 0x4 - core index']
  #allocation1 [shape = 'u32[144,128]{1,0:T(1,128)}', space=vmem, size = 0x12000, scoped, tag = 'internal scratch']
  #allocation2 [shape = 'f32[64,384]{1,0:T(8,128)}', space=vmem, size = 0x18000, scoped, tag = 'scratch operand']
  #allocation3 [shape = 'f32[8,128]{1,0:T(8,128)}', space=vmem, size = 0x1000, scoped, tag = 'scratch operand']
  %s0 = inlined_call_operand.vmem [shape: f32[1,1,64,16], index: 0, kind: input, shape index: {}]
  %s1 = inlined_call_operand.hbm [shape: f32[1,8,128], index: 1, kind: input, shape index: {}, may-alias: {1,9}]
  %s2 = inlined_call_operand.vmem [shape: f32[16,384], index: 2, kind: input, shape index: {}]
  %s3 = inlined_call_operand.hbm [shape: f32[128,384], index: 3, kind: input, shape index: {}]
  %s4 = inlined_call_operand.vmem [shape: f32[1,384], index: 4, kind: input, shape index: {}]
  %s5 = inlined_call_operand.vmem [shape: f32[1,384], index: 5, kind: input, shape index: {}]
  %s6 = inlined_call_operand.hbm [shape: f32[128,128], index: 6, kind: input, shape index: {}]
  %s7 = inlined_call_operand.vmem [shape: f32[1,128], index: 7, kind: input, shape index: {}]
  %s8 = inlined_call_operand.hbm [shape: f32[1,8,128], index: 8, kind: output, shape index: {0}]
  %s9 = inlined_call_operand.hbm [shape: f32[1,8,128], index: 9, kind: output, shape index: {1}, may-alias: {1,9}]
  %10 = xla_tuple %s8, %s9
  %s11 = sld [smem:[#allocation0]]
  $region70: #{tpu_custom_call.1} parent=0
    _
  %s13 = ssub.s32 1, %s11
  %s14 = scalar_select 0, %s13, %s11
  $region1: #{tpu_custom_call.1} parent=0
    #allocation4 [shape = 'u8[4096]{0}', space=vmem, size = 0x1000, scoped, tag = 'input window, operand 1, single buffered']
    #allocation5 [shape = 's32[1]{0}', space=sflag, size = 0x4, scoped, tag = 'scoped memory for tpu_custom_call.1']
    #allocation6 [shape = 's32[1]{0}', space=sflag, size = 0x4, scoped, tag = 'scoped memory for tpu_custom_call.1']
    #allocation7 [shape = 'u8[196608]{0}', space=vmem, size = 0x30000, scoped, tag = 'input window, operand 3, single buffered']
    #allocation8 [shape = 's32[1]{0}', space=sflag, size = 0x4, scoped, tag = 'scoped memory for tpu_custom_call.1']
    #allocation9 [shape = 'u8[65536]{0}', space=vmem, size = 0x10000, scoped, tag = 'input window, operand 6, single buffered']
    #allocation10 [shape = 'u8[4096]{0}', space=vmem, size = 0x1000, scoped, tag = 'output window, operand 0, single buffered']
    #allocation11 [shape = 'u8[4096]{0}', space=vmem, size = 0x1000, scoped, tag = 'output window, operand 1, single buffered']
    #allocation12 [shape = 's32[1]{0}', space=sflag, size = 0x4, scoped, tag = 'scoped memory for tpu_custom_call.1']
    %15 = vsyncpa [#allocation5], 0
    %16 = vsyncpa [#allocation8], 0
    %17 = vsyncpa [#allocation6], 0
    %18 = vsyncpa [#allocation12], 0
    // Predicated region
    $region2: #{tpu_custom_call.1} parent=1 // pred_check
      _
    $region3: #{tpu_custom_call.1} parent=1 // pred_check_branch
      %20 = sbr.rel (0) target = $region5
    $region4: #{tpu_custom_call.1} parent=1 // pred_region
      _
    $region5: #{tpu_custom_call.1} parent=1 // pred_fallthru
      _
    // Predicated region
    $region6: #{tpu_custom_call.1} parent=1 // pred_check
      _
    $region7: #{tpu_custom_call.1} parent=1 // pred_check_branch
      %22 = sbr.rel (0) target = $region9
    $region8: #{tpu_custom_call.1} parent=1 // pred_region
      %s24 = ssub.s32 128, 128
      %25 = vsyncadd [#allocation5], %s24
      %s27 = sshll.u32 [#allocation4], 4
      %s28 = int_to_ptr.vmem [resolvable:$true] %s27
      %30 = dma.hbm_to_vmem [thread:$0]  %s1, 128, %s28, [#allocation5]
    $region9: #{tpu_custom_call.1} parent=1 // pred_fallthru
      _
    // Predicated region
    $region10: #{tpu_custom_call.1} parent=1 // pred_check
      _
    $region11: #{tpu_custom_call.1} parent=1 // pred_check_branch
      %32 = sbr.rel (0) target = $region13
    $region12: #{tpu_custom_call.1} parent=1 // pred_region
      _
    $region13: #{tpu_custom_call.1} parent=1 // pred_fallthru
      _
    // Predicated region
    $region14: #{tpu_custom_call.1} parent=1 // pred_check
      _
    $region15: #{tpu_custom_call.1} parent=1 // pred_check_branch
      %34 = sbr.rel (0) target = $region17
    $region16: #{tpu_custom_call.1} parent=1 // pred_region
      %s36 = ssub.s32 6144, 6144
      %37 = vsyncadd [#allocation8], %s36
      %s38 = sshll.u32 [#allocation7], 4
      %s39 = int_to_ptr.vmem [resolvable:$true] %s38
      %44 = dma.hbm_to_vmem [thread:$0]  %s3, 6144, %s39, [#allocation8], 384, 384, 24
    $region17: #{tpu_custom_call.1} parent=1 // pred_fallthru
      _
    // Predicated region
    $region18: #{tpu_custom_call.1} parent=1 // pred_check
      _
    $region19: #{tpu_custom_call.1} parent=1 // pred_check_branch
      %46 = sbr.rel (0) target = $region21
    $region20: #{tpu_custom_call.1} parent=1 // pred_region
      _
    $region21: #{tpu_custom_call.1} parent=1 // pred_fallthru
      _
    // Predicated region
    $region22: #{tpu_custom_call.1} parent=1 // pred_check
      _
    $region23: #{tpu_custom_call.1} parent=1 // pred_check_branch
      %48 = sbr.rel (0) target = $region25
    $region24: #{tpu_custom_call.1} parent=1 // pred_region
      _
    $region25: #{tpu_custom_call.1} parent=1 // pred_fallthru
      _
    // Predicated region
    $region26: #{tpu_custom_call.1} parent=1 // pred_check
      _
    $region27: #{tpu_custom_call.1} parent=1 // pred_check_branch
      %50 = sbr.rel (0) target = $region29
    $region28: #{tpu_custom_call.1} parent=1 // pred_region
      %s52 = ssub.s32 2048, 2048
      %53 = vsyncadd [#allocation8], %s52
      %s54 = sshll.u32 [#allocation9], 4
      %s55 = int_to_ptr.vmem [resolvable:$true] %s54
      %60 = dma.hbm_to_vmem [thread:$0]  %s6, 2048, %s55, [#allocation8], 128, 128, 8
    $region29: #{tpu_custom_call.1} parent=1 // pred_fallthru
      _
    // Predicated region
    $region30: #{tpu_custom_call.1} parent=1 // pred_check
      _
    $region31: #{tpu_custom_call.1} parent=1 // pred_check_branch
      %62 = sbr.rel (0) target = $region33
    $region32: #{tpu_custom_call.1} parent=1 // pred_region
      _
    $region33: #{tpu_custom_call.1} parent=1 // pred_fallthru
      _
    // Predicated region
    $region34: #{tpu_custom_call.1} parent=1 // pred_check
      _
    $region35: #{tpu_custom_call.1} parent=1 // pred_check_branch
      %64 = sbr.rel (0) target = $region37
    $region36: #{tpu_custom_call.1} parent=1 // pred_region
      %65 = dma.done [#allocation5], 128
    $region37: #{tpu_custom_call.1} parent=1 // pred_fallthru
      _
    // Predicated region
    $region38: #{tpu_custom_call.1} parent=1 // pred_check
      _
    $region39: #{tpu_custom_call.1} parent=1 // pred_check_branch
      %67 = sbr.rel (0) target = $region41
    $region40: #{tpu_custom_call.1} parent=1 // pred_region
      %68 = dma.done [#allocation8], 6144
    $region41: #{tpu_custom_call.1} parent=1 // pred_fallthru
      _
    // Predicated region
    $region42: #{tpu_custom_call.1} parent=1 // pred_check
      _
    $region43: #{tpu_custom_call.1} parent=1 // pred_check_branch
      %70 = sbr.rel (0) target = $region45
    $region44: #{tpu_custom_call.1} parent=1 // pred_region
      %71 = dma.done [#allocation8], 2048
    $region45: #{tpu_custom_call.1} parent=1 // pred_fallthru
      _
    %p72 = scmp.eq.s32.totalorder 0, 0
    // Predicated region
    $region46: #{tpu_custom_call.1} parent=1 // pred_check
      %p73 = pneg %p72
    $region47: #{tpu_custom_call.1} parent=1 // pred_check_branch
      %75 = sbr.rel (%p73) target = $region49
    $region48: #{tpu_custom_call.1} parent=1 // pred_region
      %v76 = vld [vmem:[#allocation4] sm:$0xff]
      %77 = vst [vmem:[#allocation3] sm:$0xff] %v76
    $region49: #{tpu_custom_call.1} parent=1 // pred_fallthru
      _
    %v78 = vld [vmem:[%s0] sm:$0xff]
    %v79 = vld [vmem:[%s0 + $0x8] sm:$0xff]
    %v80 = vld [vmem:[%s0 + $0x10] sm:$0xff]
    %v81 = vld [vmem:[%s0 + $0x18] sm:$0xff]
    %v82 = vld [vmem:[%s0 + $0x20] sm:$0xff]
    %v83 = vld [vmem:[%s0 + $0x28] sm:$0xff]
    %v84 = vld [vmem:[%s0 + $0x30] sm:$0xff]
    %v85 = vld [vmem:[%s0 + $0x38] sm:$0xff]
    %v86 = vld [vmem:[%s2] sm:$0xff]
    %v87 = vld [vmem:[%s2 + $0x8] sm:$0xff]
    %v88 = vld [vmem:[%s2 + $0x10] sm:$0xff]
    %v89 = vld [vmem:[%s2 + $0x18] sm:$0xff]
    %v90 = vld [vmem:[%s2 + $0x20] sm:$0xff]
    %v91 = vld [vmem:[%s2 + $0x28] sm:$0xff]
    %v92 = vld [vmem:[%s4] sm:$0x7]
    %v94 = vlaneseq
    %v95 = vshrl.u32 %v94, 7
    %v96 = vsub.s32 0, %v95
    %v97 = vrot.slane %v92, %v96
    %v98 = vlaneseq
    %v99 = vshrl.u32 %v98, 7
    %v100 = vsub.s32 1, %v99
    %v101 = vrot.slane %v92, %v100
    %v102 = vlaneseq
    %v103 = vshrl.u32 %v102, 7
    %v104 = vsub.s32 2, %v103
    %v105 = vrot.slane %v92, %v104
    %vm109 = vcmask 130048
    %v111 = vsel %vm109, %v78, 0
    %v114 = vsel %vm109, %v79, 0
    %v117 = vsel %vm109, %v80, 0
    %v120 = vsel %vm109, %v81, 0
    %v123 = vsel %vm109, %v82, 0
    %v126 = vsel %vm109, %v83, 0
    %v129 = vsel %vm109, %v84, 0
    %v132 = vsel %vm109, %v85, 0
    %134 = vmatprep.subr.mxu0 0.0
    %135 = vmatpush1.msra.mxu0 0.0
    %136 = vmatprep.subr.mxu0 0.0
    %137 = vmatpush1.msra.mxu0 0.0
    %138 = vmatprep.subr.mxu0 0.0
    %139 = vmatpush1.msra.mxu0 0.0
    %140 = vmatprep.subr.mxu0 0.0
    %141 = vmatpush1.msra.mxu0 0.0
    %142 = vmatprep.subr.mxu0 0.0
    %143 = vmatpush1.msra.mxu0 0.0
    %144 = vmatprep.subr.mxu0 0.0
    %145 = vmatpush1.msra.mxu0 0.0
    %146 = vmatprep.subr.mxu0 0.0
    %147 = vmatpush1.msra.mxu0 0.0
    %148 = vmatprep.subr.mxu0 0.0
    %149 = vmatpush1.msra.mxu0 0.0
    %150 = vmatprep.subr.mxu0 0.0
    %151 = vmatpush1.msra.mxu0 0.0
    %152 = vmatprep.subr.mxu0 0.0
    %153 = vmatpush1.msra.mxu0 0.0
    %154 = vmatprep.subr.mxu0 0.0
    %155 = vmatpush1.msra.mxu0 0.0
    %156 = vmatprep.subr.mxu0 0.0
    %157 = vmatpush1.msra.mxu0 0.0
    %158 = vmatprep.subr.mxu0 0.0
    %159 = vmatpush1.msra.mxu0 0.0
    %160 = vmatprep.subr.mxu0 0.0
    %161 = vmatpush1.msra.mxu0 0.0
    %162 = vmatprep.subr.mxu0 %v90
    %163 = vmatpush1.msra.mxu0 %v89
    %164 = vmatprep.subr.mxu0 %v87
    %165 = vmatpush1.msra.mxu0 %v86
    %166 = vmatprep.subr.mxu0 0.0
    %167 = vmatpush2.msra.mxu0 0.0
    %168 = vmatprep.subr.mxu0 0.0
    %169 = vmatpush2.msra.mxu0 0.0
    %170 = vmatprep.subr.mxu0 0.0
    %171 = vmatpush2.msra.mxu0 0.0
    %172 = vmatprep.subr.mxu0 0.0
    %173 = vmatpush2.msra.mxu0 0.0
    %174 = vmatprep.subr.mxu0 0.0
    %175 = vmatpush2.msra.mxu0 0.0
    %176 = vmatprep.subr.mxu0 0.0
    %177 = vmatpush2.msra.mxu0 0.0
    %178 = vmatprep.subr.mxu0 0.0
    %179 = vmatpush2.msra.mxu0 0.0
    %180 = vmatprep.subr.mxu0 0.0
    %181 = vmatpush2.msra.mxu0 0.0
    %182 = vmatprep.subr.mxu0 0.0
    %183 = vmatpush2.msra.mxu0 0.0
    %184 = vmatprep.subr.mxu0 0.0
    %185 = vmatpush2.msra.mxu0 0.0
    %186 = vmatprep.subr.mxu0 0.0
    %187 = vmatpush2.msra.mxu0 0.0
    %188 = vmatprep.subr.mxu0 0.0
    %189 = vmatpush2.msra.mxu0 0.0
    %190 = vmatprep.subr.mxu0 0.0
    %191 = vmatpush2.msra.mxu0 0.0
    %192 = vmatprep.subr.mxu0 0.0
    %193 = vmatpush2.msra.mxu0 0.0
    %194 = vmatprep.subr.mxu0 0.0
    %195 = vmatpush2.msra.mxu0 0.0
    %196 = vmatprep.subr.mxu0 0.0
    %197 = vmatpush2.msra.mxu0 0.0
    %198 = vmatprep.mubr.f32.mxu0 0.0
    %199 = vmatmul.mubr.f32.gmra.mxu0 %v111
    %v200 = vpop.f32.mrf.mxu0
    %v201 = vadd.f32 %v97, %v200
    %v202 = vpop.f32.mrf.mxu0
    %v203 = vadd.f32 %v101, %v202
    %204 = vmatprep.mubr.f32.mxu0 0.0
    %205 = vmatmul.mubr.f32.gmra.mxu0 %v114
    %v206 = vpop.f32.mrf.mxu0
    %v207 = vadd.f32 %v97, %v206
    %v208 = vpop.f32.mrf.mxu0
    %v209 = vadd.f32 %v101, %v208
    %210 = vmatprep.mubr.f32.mxu0 0.0
    %211 = vmatmul.mubr.f32.gmra.mxu0 %v117
    %v212 = vpop.f32.mrf.mxu0
    %v213 = vadd.f32 %v97, %v212
    %v214 = vpop.f32.mrf.mxu0
    %v215 = vadd.f32 %v101, %v214
    %216 = vmatprep.mubr.f32.mxu0 0.0
    %217 = vmatmul.mubr.f32.gmra.mxu0 %v120
    %v218 = vpop.f32.mrf.mxu0
    %v219 = vadd.f32 %v97, %v218
    %v220 = vpop.f32.mrf.mxu0
    %v221 = vadd.f32 %v101, %v220
    %222 = vmatprep.mubr.f32.mxu0 0.0
    %223 = vmatmul.mubr.f32.gmra.mxu0 %v123
    %v224 = vpop.f32.mrf.mxu0
    %v225 = vadd.f32 %v97, %v224
    %v226 = vpop.f32.mrf.mxu0
    %v227 = vadd.f32 %v101, %v226
    %228 = vmatprep.mubr.f32.mxu0 0.0
    %229 = vmatmul.mubr.f32.gmra.mxu0 %v126
    %v230 = vpop.f32.mrf.mxu0
    %v231 = vadd.f32 %v97, %v230
    %v232 = vpop.f32.mrf.mxu0
    %v233 = vadd.f32 %v101, %v232
    %234 = vmatprep.mubr.f32.mxu0 0.0
    %235 = vmatmul.mubr.f32.gmra.mxu0 %v129
    %v236 = vpop.f32.mrf.mxu0
    %v237 = vadd.f32 %v97, %v236
    %v238 = vpop.f32.mrf.mxu0
    %v239 = vadd.f32 %v101, %v238
    %240 = vmatprep.mubr.f32.mxu0 0.0
    %241 = vmatmul.mubr.f32.gmra.mxu0 %v132
    %v242 = vpop.f32.mrf.mxu0
    %v243 = vadd.f32 %v97, %v242
    %v244 = vpop.f32.mrf.mxu0
    %v245 = vadd.f32 %v101, %v244
    %246 = vdwg.mxu0
    %247 = vmatprep.subr.mxu0 0.0
    %248 = vmatpush1.msra.mxu0 0.0
    %249 = vmatprep.subr.mxu0 0.0
    %250 = vmatpush1.msra.mxu0 0.0
    %251 = vmatprep.subr.mxu0 0.0
    %252 = vmatpush1.msra.mxu0 0.0
    %253 = vmatprep.subr.mxu0 0.0
    %254 = vmatpush1.msra.mxu0 0.0
    %255 = vmatprep.subr.mxu0 0.0
    %256 = vmatpush1.msra.mxu0 0.0
    %257 = vmatprep.subr.mxu0 0.0
    %258 = vmatpush1.msra.mxu0 0.0
    %259 = vmatprep.subr.mxu0 0.0
    %260 = vmatpush1.msra.mxu0 0.0
    %261 = vmatprep.subr.mxu0 0.0
    %262 = vmatpush1.msra.mxu0 0.0
    %263 = vmatprep.subr.mxu0 0.0
    %264 = vmatpush1.msra.mxu0 0.0
    %265 = vmatprep.subr.mxu0 0.0
    %266 = vmatpush1.msra.mxu0 0.0
    %267 = vmatprep.subr.mxu0 0.0
    %268 = vmatpush1.msra.mxu0 0.0
    %269 = vmatprep.subr.mxu0 0.0
    %270 = vmatpush1.msra.mxu0 0.0
    %271 = vmatprep.subr.mxu0 0.0
    %272 = vmatpush1.msra.mxu0 0.0
    %273 = vmatprep.subr.mxu0 0.0
    %274 = vmatpush1.msra.mxu0 0.0
    %275 = vmatprep.subr.mxu0 0.0
    %276 = vmatpush1.msra.mxu0 %v91
    %277 = vmatprep.subr.mxu0 0.0
    %278 = vmatpush1.msra.mxu0 %v88
    %279 = vmatprep.subr.mxu0 0.0
    %280 = vmatpush2.msra.mxu0 0.0
    %281 = vmatprep.subr.mxu0 0.0
    %282 = vmatpush2.msra.mxu0 0.0
    %283 = vmatprep.subr.mxu0 0.0
    %284 = vmatpush2.msra.mxu0 0.0
    %285 = vmatprep.subr.mxu0 0.0
    %286 = vmatpush2.msra.mxu0 0.0
    %287 = vmatprep.subr.mxu0 0.0
    %288 = vmatpush2.msra.mxu0 0.0
    %289 = vmatprep.subr.mxu0 0.0
    %290 = vmatpush2.msra.mxu0 0.0
    %291 = vmatprep.subr.mxu0 0.0
    %292 = vmatpush2.msra.mxu0 0.0
    %293 = vmatprep.subr.mxu0 0.0
    %294 = vmatpush2.msra.mxu0 0.0
    %295 = vmatprep.subr.mxu0 0.0
    %296 = vmatpush2.msra.mxu0 0.0
    %297 = vmatprep.subr.mxu0 0.0
    %298 = vmatpush2.msra.mxu0 0.0
    %299 = vmatprep.subr.mxu0 0.0
    %300 = vmatpush2.msra.mxu0 0.0
    %301 = vmatprep.subr.mxu0 0.0
    %302 = vmatpush2.msra.mxu0 0.0
    %303 = vmatprep.subr.mxu0 0.0
    %304 = vmatpush2.msra.mxu0 0.0
    %305 = vmatprep.subr.mxu0 0.0
    %306 = vmatpush2.msra.mxu0 0.0
    %307 = vmatprep.subr.mxu0 0.0
    %308 = vmatpush2.msra.mxu0 0.0
    %309 = vmatprep.subr.mxu0 0.0
    %310 = vmatpush2.msra.mxu0 0.0
    %311 = vmatprep.mubr.f32.mxu0 0.0
    %312 = vmatmul.mubr.f32.gmra.mxu0 %v111
    %v313 = vpop.f32.mrf.mxu0
    %v314 = vadd.f32 %v105, %v313
    %v315 = vpop.f32.mrf.mxu0
    %316 = vmatprep.mubr.f32.mxu0 0.0
    %317 = vmatmul.mubr.f32.gmra.mxu0 %v114
    %v318 = vpop.f32.mrf.mxu0
    %v319 = vadd.f32 %v105, %v318
    %v320 = vpop.f32.mrf.mxu0
    %321 = vmatprep.mubr.f32.mxu0 0.0
    %322 = vmatmul.mubr.f32.gmra.mxu0 %v117
    %v323 = vpop.f32.mrf.mxu0
    %v324 = vadd.f32 %v105, %v323
    %v325 = vpop.f32.mrf.mxu0
    %326 = vmatprep.mubr.f32.mxu0 0.0
    %327 = vmatmul.mubr.f32.gmra.mxu0 %v120
    %v328 = vpop.f32.mrf.mxu0
    %v329 = vadd.f32 %v105, %v328
    %v330 = vpop.f32.mrf.mxu0
    %331 = vmatprep.mubr.f32.mxu0 0.0
    %332 = vmatmul.mubr.f32.gmra.mxu0 %v123
    %v333 = vpop.f32.mrf.mxu0
    %v334 = vadd.f32 %v105, %v333
    %v335 = vpop.f32.mrf.mxu0
    %336 = vmatprep.mubr.f32.mxu0 0.0
    %337 = vmatmul.mubr.f32.gmra.mxu0 %v126
    %v338 = vpop.f32.mrf.mxu0
    %v339 = vadd.f32 %v105, %v338
    %v340 = vpop.f32.mrf.mxu0
    %341 = vmatprep.mubr.f32.mxu0 0.0
    %342 = vmatmul.mubr.f32.gmra.mxu0 %v129
    %v343 = vpop.f32.mrf.mxu0
    %v344 = vadd.f32 %v105, %v343
    %v345 = vpop.f32.mrf.mxu0
    %346 = vmatprep.mubr.f32.mxu0 0.0
    %347 = vmatmul.mubr.f32.gmra.mxu0 %v132
    %v348 = vpop.f32.mrf.mxu0
    %v349 = vadd.f32 %v105, %v348
    %v350 = vpop.f32.mrf.mxu0
    %351 = vdwg.mxu0
    %352 = vst [vmem:[#allocation2] sm:$0xff] %v201
    %353 = vst [vmem:[#allocation2 + $0x8] sm:$0xff] %v203
    %354 = vst [vmem:[#allocation2 + $0x10] sm:$0xff] %v314
    %355 = vst [vmem:[#allocation2 + $0x18] sm:$0xff] %v207
    %356 = vst [vmem:[#allocation2 + $0x20] sm:$0xff] %v209
    %357 = vst [vmem:[#allocation2 + $0x28] sm:$0xff] %v319
    %358 = vst [vmem:[#allocation2 + $0x30] sm:$0xff] %v213
    %359 = vst [vmem:[#allocation2 + $0x38] sm:$0xff] %v215
    %360 = vst [vmem:[#allocation2 + $0x40] sm:$0xff] %v324
    %361 = vst [vmem:[#allocation2 + $0x48] sm:$0xff] %v219
    %362 = vst [vmem:[#allocation2 + $0x50] sm:$0xff] %v221
    %363 = vst [vmem:[#allocation2 + $0x58] sm:$0xff] %v329
    %364 = vst [vmem:[#allocation2 + $0x60] sm:$0xff] %v225
    %365 = vst [vmem:[#allocation2 + $0x68] sm:$0xff] %v227
    %366 = vst [vmem:[#allocation2 + $0x70] sm:$0xff] %v334
    %367 = vst [vmem:[#allocation2 + $0x78] sm:$0xff] %v231
    %368 = vst [vmem:[#allocation2 + $0x80] sm:$0xff] %v233
    %369 = vst [vmem:[#allocation2 + $0x88] sm:$0xff] %v339
    %370 = vst [vmem:[#allocation2 + $0x90] sm:$0xff] %v237
    %371 = vst [vmem:[#allocation2 + $0x98] sm:$0xff] %v239
    %372 = vst [vmem:[#allocation2 + $0xa0] sm:$0xff] %v344
    %373 = vst [vmem:[#allocation2 + $0xa8] sm:$0xff] %v243
    %374 = vst [vmem:[#allocation2 + $0xb0] sm:$0xff] %v245
    %375 = vst [vmem:[#allocation2 + $0xb8] sm:$0xff] %v349
    %v376 = vld [vmem:[#allocation3] sm:$0xff]
    %s377 = smul.u32 0, 3
    %s378 = smul.addr %s377, 8
    %s379 = scalar_lea.vmem [#allocation2], %s378
    %v380 = vld [vmem:[%s379] sm:$0xff]
    %v381 = vld [vmem:[%s379 + $0x8] sm:$0xff]
    %v382 = vld [vmem:[%s379 + $0x10] sm:$0xff]
    %v383 = vld [vmem:[#allocation7] sm:$0xff]
    %v384 = vld [vmem:[#allocation7 + $0x8] sm:$0xff]
    %v385 = vld [vmem:[#allocation7 + $0x10] sm:$0xff]
    %v386 = vld [vmem:[#allocation7 + $0x18] sm:$0xff]
    %v387 = vld [vmem:[#allocation7 + $0x20] sm:$0xff]
    %v388 = vld [vmem:[#allocation7 + $0x28] sm:$0xff]
    %v389 = vld [vmem:[#allocation7 + $0x30] sm:$0xff]
    %v390 = vld [vmem:[#allocation7 + $0x38] sm:$0xff]
    %v391 = vld [vmem:[#allocation7 + $0x40] sm:$0xff]
    %v392 = vld [vmem:[#allocation7 + $0x48] sm:$0xff]
    %v393 = vld [vmem:[#allocation7 + $0x50] sm:$0xff]
    %v394 = vld [vmem:[#allocation7 + $0x58] sm:$0xff]
    %v395 = vld [vmem:[#allocation7 + $0x60] sm:$0xff]
    %v396 = vld [vmem:[#allocation7 + $0x68] sm:$0xff]
    %v397 = vld [vmem:[#allocation7 + $0x70] sm:$0xff]
    %v398 = vld [vmem:[#allocation7 + $0x78] sm:$0xff]
    %v399 = vld [vmem:[#allocation7 + $0x80] sm:$0xff]
    %v400 = vld [vmem:[#allocation7 + $0x88] sm:$0xff]
    %v401 = vld [vmem:[#allocation7 + $0x90] sm:$0xff]
    %v402 = vld [vmem:[#allocation7 + $0x98] sm:$0xff]
    %v403 = vld [vmem:[#allocation7 + $0xa0] sm:$0xff]
    %v404 = vld [vmem:[#allocation7 + $0xa8] sm:$0xff]
    %v405 = vld [vmem:[#allocation7 + $0xb0] sm:$0xff]
    %v406 = vld [vmem:[#allocation7 + $0xb8] sm:$0xff]
    %v407 = vld [vmem:[#allocation7 + $0xc0] sm:$0xff]
    %v408 = vld [vmem:[#allocation7 + $0xc8] sm:$0xff]
    %v409 = vld [vmem:[#allocation7 + $0xd0] sm:$0xff]
    %v410 = vld [vmem:[#allocation7 + $0xd8] sm:$0xff]
    %v411 = vld [vmem:[#allocation7 + $0xe0] sm:$0xff]
    %v412 = vld [vmem:[#allocation7 + $0xe8] sm:$0xff]
    %v413 = vld [vmem:[#allocation7 + $0xf0] sm:$0xff]
    %v414 = vld [vmem:[#allocation7 + $0xf8] sm:$0xff]
    %v415 = vld [vmem:[#allocation7 + $0x100] sm:$0xff]
    %v416 = vld [vmem:[#allocation7 + $0x108] sm:$0xff]
    %v417 = vld [vmem:[#allocation7 + $0x110] sm:$0xff]
    %v418 = vld [vmem:[#allocation7 + $0x118] sm:$0xff]
    %v419 = vld [vmem:[#allocation7 + $0x120] sm:$0xff]
    %v420 = vld [vmem:[#allocation7 + $0x128] sm:$0xff]
    %v421 = vld [vmem:[#allocation7 + $0x130] sm:$0xff]
    %v422 = vld [vmem:[#allocation7 + $0x138] sm:$0xff]
    %v423 = vld [vmem:[#allocation7 + $0x140] sm:$0xff]
    %v424 = vld [vmem:[#allocation7 + $0x148] sm:$0xff]
    %v425 = vld [vmem:[#allocation7 + $0x150] sm:$0xff]
    %v426 = vld [vmem:[#allocation7 + $0x158] sm:$0xff]
    %v427 = vld [vmem:[#allocation7 + $0x160] sm:$0xff]
    %v428 = vld [vmem:[#allocation7 + $0x168] sm:$0xff]
    %v429 = vld [vmem:[#allocation7 + $0x170] sm:$0xff]
    %v430 = vld [vmem:[#allocation7 + $0x178] sm:$0xff]
    %v431 = vld [vmem:[%s5] sm:$0x7]
    %v433 = vlaneseq
    %v434 = vshrl.u32 %v433, 7
    %v435 = vsub.s32 0, %v434
    %v436 = vrot.slane %v431, %v435
    %v437 = vlaneseq
    %v438 = vshrl.u32 %v437, 7
    %v439 = vsub.s32 1, %v438
    %v440 = vrot.slane %v431, %v439
    %v441 = vlaneseq
    %v442 = vshrl.u32 %v441, 7
    %v443 = vsub.s32 2, %v442
    %v444 = vrot.slane %v431, %v443
    %448 = vmatprep.subr.mxu0 %v429
    %449 = vmatpush1.msra.mxu0 %v428
    %450 = vmatprep.subr.mxu0 %v426
    %451 = vmatpush1.msra.mxu0 %v425
    %452 = vmatprep.subr.mxu0 %v423
    %453 = vmatpush1.msra.mxu0 %v422
    %454 = vmatprep.subr.mxu0 %v420
    %455 = vmatpush1.msra.mxu0 %v419
    %456 = vmatprep.subr.mxu0 %v417
    %457 = vmatpush1.msra.mxu0 %v416
    %458 = vmatprep.subr.mxu0 %v414
    %459 = vmatpush1.msra.mxu0 %v413
    %460 = vmatprep.subr.mxu0 %v411
    %461 = vmatpush1.msra.mxu0 %v410
    %462 = vmatprep.subr.mxu0 %v408
    %463 = vmatpush1.msra.mxu0 %v407
    %464 = vmatprep.subr.mxu0 %v405
    %465 = vmatpush1.msra.mxu0 %v404
    %466 = vmatprep.subr.mxu0 %v402
    %467 = vmatpush1.msra.mxu0 %v401
    %468 = vmatprep.subr.mxu0 %v399
    %469 = vmatpush1.msra.mxu0 %v398
    %470 = vmatprep.subr.mxu0 %v396
    %471 = vmatpush1.msra.mxu0 %v395
    %472 = vmatprep.subr.mxu0 %v393
    %473 = vmatpush1.msra.mxu0 %v392
    %474 = vmatprep.subr.mxu0 %v390
    %475 = vmatpush1.msra.mxu0 %v389
    %476 = vmatprep.subr.mxu0 %v387
    %477 = vmatpush1.msra.mxu0 %v386
    %478 = vmatprep.subr.mxu0 %v384
    %479 = vmatpush1.msra.mxu0 %v383
    %480 = vmatprep.subr.mxu0 0.0
    %481 = vmatpush2.msra.mxu0 0.0
    %482 = vmatprep.subr.mxu0 0.0
    %483 = vmatpush2.msra.mxu0 0.0
    %484 = vmatprep.subr.mxu0 0.0
    %485 = vmatpush2.msra.mxu0 0.0
    %486 = vmatprep.subr.mxu0 0.0
    %487 = vmatpush2.msra.mxu0 0.0
    %488 = vmatprep.subr.mxu0 0.0
    %489 = vmatpush2.msra.mxu0 0.0
    %490 = vmatprep.subr.mxu0 0.0
    %491 = vmatpush2.msra.mxu0 0.0
    %492 = vmatprep.subr.mxu0 0.0
    %493 = vmatpush2.msra.mxu0 0.0
    %494 = vmatprep.subr.mxu0 0.0
    %495 = vmatpush2.msra.mxu0 0.0
    %496 = vmatprep.subr.mxu0 0.0
    %497 = vmatpush2.msra.mxu0 0.0
    %498 = vmatprep.subr.mxu0 0.0
    %499 = vmatpush2.msra.mxu0 0.0
    %500 = vmatprep.subr.mxu0 0.0
    %501 = vmatpush2.msra.mxu0 0.0
    %502 = vmatprep.subr.mxu0 0.0
    %503 = vmatpush2.msra.mxu0 0.0
    %504 = vmatprep.subr.mxu0 0.0
    %505 = vmatpush2.msra.mxu0 0.0
    %506 = vmatprep.subr.mxu0 0.0
    %507 = vmatpush2.msra.mxu0 0.0
    %508 = vmatprep.subr.mxu0 0.0
    %509 = vmatpush2.msra.mxu0 0.0
    %510 = vmatprep.subr.mxu0 0.0
    %511 = vmatpush2.msra.mxu0 0.0
    %512 = vmatprep.mubr.f32.mxu0 0.0
    %513 = vmatmul.mubr.f32.gmra.mxu0 %v376
    %v514 = vpop.f32.mrf.mxu0
    %v515 = vadd.f32 %v436, %v514
    %v516 = vpop.f32.mrf.mxu0
    %v517 = vadd.f32 %v440, %v516
    %518 = vdwg.mxu0
    %519 = vmatprep.subr.mxu0 0.0
    %520 = vmatpush1.msra.mxu0 %v430
    %521 = vmatprep.subr.mxu0 0.0
    %522 = vmatpush1.msra.mxu0 %v427
    %523 = vmatprep.subr.mxu0 0.0
    %524 = vmatpush1.msra.mxu0 %v424
    %525 = vmatprep.subr.mxu0 0.0
    %526 = vmatpush1.msra.mxu0 %v421
    %527 = vmatprep.subr.mxu0 0.0
    %528 = vmatpush1.msra.mxu0 %v418
    %529 = vmatprep.subr.mxu0 0.0
    %530 = vmatpush1.msra.mxu0 %v415
    %531 = vmatprep.subr.mxu0 0.0
    %532 = vmatpush1.msra.mxu0 %v412
    %533 = vmatprep.subr.mxu0 0.0
    %534 = vmatpush1.msra.mxu0 %v409
    %535 = vmatprep.subr.mxu0 0.0
    %536 = vmatpush1.msra.mxu0 %v406
    %537 = vmatprep.subr.mxu0 0.0
    %538 = vmatpush1.msra.mxu0 %v403
    %539 = vmatprep.subr.mxu0 0.0
    %540 = vmatpush1.msra.mxu0 %v400
    %541 = vmatprep.subr.mxu0 0.0
    %542 = vmatpush1.msra.mxu0 %v397
    %543 = vmatprep.subr.mxu0 0.0
    %544 = vmatpush1.msra.mxu0 %v394
    %545 = vmatprep.subr.mxu0 0.0
    %546 = vmatpush1.msra.mxu0 %v391
    %547 = vmatprep.subr.mxu0 0.0
    %548 = vmatpush1.msra.mxu0 %v388
    %549 = vmatprep.subr.mxu0 0.0
    %550 = vmatpush1.msra.mxu0 %v385
    %551 = vmatprep.subr.mxu0 0.0
    %552 = vmatpush2.msra.mxu0 0.0
    %553 = vmatprep.subr.mxu0 0.0
    %554 = vmatpush2.msra.mxu0 0.0
    %555 = vmatprep.subr.mxu0 0.0
    %556 = vmatpush2.msra.mxu0 0.0
    %557 = vmatprep.subr.mxu0 0.0
    %558 = vmatpush2.msra.mxu0 0.0
    %559 = vmatprep.subr.mxu0 0.0
    %560 = vmatpush2.msra.mxu0 0.0
    %561 = vmatprep.subr.mxu0 0.0
    %562 = vmatpush2.msra.mxu0 0.0
    %563 = vmatprep.subr.mxu0 0.0
    %564 = vmatpush2.msra.mxu0 0.0
    %565 = vmatprep.subr.mxu0 0.0
    %566 = vmatpush2.msra.mxu0 0.0
    %567 = vmatprep.subr.mxu0 0.0
    %568 = vmatpush2.msra.mxu0 0.0
    %569 = vmatprep.subr.mxu0 0.0
    %570 = vmatpush2.msra.mxu0 0.0
    %571 = vmatprep.subr.mxu0 0.0
    %572 = vmatpush2.msra.mxu0 0.0
    %573 = vmatprep.subr.mxu0 0.0
    %574 = vmatpush2.msra.mxu0 0.0
    %575 = vmatprep.subr.mxu0 0.0
    %576 = vmatpush2.msra.mxu0 0.0
    %577 = vmatprep.subr.mxu0 0.0
    %578 = vmatpush2.msra.mxu0 0.0
    %579 = vmatprep.subr.mxu0 0.0
    %580 = vmatpush2.msra.mxu0 0.0
    %581 = vmatprep.subr.mxu0 0.0
    %582 = vmatpush2.msra.mxu0 0.0
    %583 = vmatprep.mubr.f32.mxu0 0.0
    %584 = vmatmul.mubr.f32.gmra.mxu0 %v376
    %v585 = vpop.f32.mrf.mxu0
    %v586 = vadd.f32 %v444, %v585
    %v587 = vpop.f32.mrf.mxu0
    %588 = vdwg.mxu0
    %v589 = vadd.f32 %v380, %v515
    %v590 = vxor.u32 %v589, 2147483648
    %v591 = vmul.f32 %v590, 1.442695
    %v592 = vpow.pop %v591
    %v593 = vadd.f32 %v592, 1.0
    %v594 = vrcp.pop %v593
    %v595 = vmul.f32 1.0, %v594
    %v596 = vadd.f32 %v381, %v517
    %v597 = vxor.u32 %v596, 2147483648
    %v598 = vmul.f32 %v597, 1.442695
    %v599 = vpow.pop %v598
    %v600 = vadd.f32 %v599, 1.0
    %v601 = vrcp.pop %v600
    %v602 = vmul.f32 1.0, %v601
    %v603 = vmul.f32 %v595, %v586
    %v604 = vadd.f32 %v382, %v603
    %v605 = vtanh.pop %v604
    %v606 = vsub.f32 1.0, %v602
    %v607 = vmul.f32 %v606, %v605
    %v608 = vmul.f32 %v602, %v376
    %v609 = vadd.f32 %v607, %v608
    %s610 = smul.u32 1, 3
    %s611 = smul.addr %s610, 8
    %s612 = scalar_lea.vmem [#allocation2], %s611
    %v613 = vld [vmem:[%s612] sm:$0xff]
    %v614 = vld [vmem:[%s612 + $0x8] sm:$0xff]
    %v615 = vld [vmem:[%s612 + $0x10] sm:$0xff]
    %616 = vmatprep.subr.mxu0 %v429
    %617 = vmatpush1.msra.mxu0 %v428
    %618 = vmatprep.subr.mxu0 %v426
    %619 = vmatpush1.msra.mxu0 %v425
    %620 = vmatprep.subr.mxu0 %v423
    %621 = vmatpush1.msra.mxu0 %v422
    %622 = vmatprep.subr.mxu0 %v420
    %623 = vmatpush1.msra.mxu0 %v419
    %624 = vmatprep.subr.mxu0 %v417
    %625 = vmatpush1.msra.mxu0 %v416
    %626 = vmatprep.subr.mxu0 %v414
    %627 = vmatpush1.msra.mxu0 %v413
    %628 = vmatprep.subr.mxu0 %v411
    %629 = vmatpush1.msra.mxu0 %v410
    %630 = vmatprep.subr.mxu0 %v408
    %631 = vmatpush1.msra.mxu0 %v407
    %632 = vmatprep.subr.mxu0 %v405
    %633 = vmatpush1.msra.mxu0 %v404
    %634 = vmatprep.subr.mxu0 %v402
    %635 = vmatpush1.msra.mxu0 %v401
    %636 = vmatprep.subr.mxu0 %v399
    %637 = vmatpush1.msra.mxu0 %v398
    %638 = vmatprep.subr.mxu0 %v396
    %639 = vmatpush1.msra.mxu0 %v395
    %640 = vmatprep.subr.mxu0 %v393
    %641 = vmatpush1.msra.mxu0 %v392
    %642 = vmatprep.subr.mxu0 %v390
    %643 = vmatpush1.msra.mxu0 %v389
    %644 = vmatprep.subr.mxu0 %v387
    %645 = vmatpush1.msra.mxu0 %v386
    %646 = vmatprep.subr.mxu0 %v384
    %647 = vmatpush1.msra.mxu0 %v383
    %648 = vmatprep.subr.mxu0 0.0
    %649 = vmatpush2.msra.mxu0 0.0
    %650 = vmatprep.subr.mxu0 0.0
    %651 = vmatpush2.msra.mxu0 0.0
    %652 = vmatprep.subr.mxu0 0.0
    %653 = vmatpush2.msra.mxu0 0.0
    %654 = vmatprep.subr.mxu0 0.0
    %655 = vmatpush2.msra.mxu0 0.0
    %656 = vmatprep.subr.mxu0 0.0
    %657 = vmatpush2.msra.mxu0 0.0
    %658 = vmatprep.subr.mxu0 0.0
    %659 = vmatpush2.msra.mxu0 0.0
    %660 = vmatprep.subr.mxu0 0.0
    %661 = vmatpush2.msra.mxu0 0.0
    %662 = vmatprep.subr.mxu0 0.0
    %663 = vmatpush2.msra.mxu0 0.0
    %664 = vmatprep.subr.mxu0 0.0
    %665 = vmatpush2.msra.mxu0 0.0
    %666 = vmatprep.subr.mxu0 0.0
    %667 = vmatpush2.msra.mxu0 0.0
    %668 = vmatprep.subr.mxu0 0.0
    %669 = vmatpush2.msra.mxu0 0.0
    %670 = vmatprep.subr.mxu0 0.0
    %671 = vmatpush2.msra.mxu0 0.0
    %672 = vmatprep.subr.mxu0 0.0
    %673 = vmatpush2.msra.mxu0 0.0
    %674 = vmatprep.subr.mxu0 0.0
    %675 = vmatpush2.msra.mxu0 0.0
    %676 = vmatprep.subr.mxu0 0.0
    %677 = vmatpush2.msra.mxu0 0.0
    %678 = vmatprep.subr.mxu0 0.0
    %679 = vmatpush2.msra.mxu0 0.0
    %680 = vmatprep.mubr.f32.mxu0 0.0
    %681 = vmatmul.mubr.f32.gmra.mxu0 %v609
    %v682 = vpop.f32.mrf.mxu0
    %v683 = vadd.f32 %v436, %v682
    %v684 = vpop.f32.mrf.mxu0
    %v685 = vadd.f32 %v440, %v684
    %686 = vdwg.mxu0
    %687 = vmatprep.subr.mxu0 0.0
    %688 = vmatpush1.msra.mxu0 %v430
    %689 = vmatprep.subr.mxu0 0.0
    %690 = vmatpush1.msra.mxu0 %v427
    %691 = vmatprep.subr.mxu0 0.0
    %692 = vmatpush1.msra.mxu0 %v424
    %693 = vmatprep.subr.mxu0 0.0
    %694 = vmatpush1.msra.mxu0 %v421
    %695 = vmatprep.subr.mxu0 0.0
    %696 = vmatpush1.msra.mxu0 %v418
    %697 = vmatprep.subr.mxu0 0.0
    %698 = vmatpush1.msra.mxu0 %v415
    %699 = vmatprep.subr.mxu0 0.0
    %700 = vmatpush1.msra.mxu0 %v412
    %701 = vmatprep.subr.mxu0 0.0
    %702 = vmatpush1.msra.mxu0 %v409
    %703 = vmatprep.subr.mxu0 0.0
    %704 = vmatpush1.msra.mxu0 %v406
    %705 = vmatprep.subr.mxu0 0.0
    %706 = vmatpush1.msra.mxu0 %v403
    %707 = vmatprep.subr.mxu0 0.0
    %708 = vmatpush1.msra.mxu0 %v400
    %709 = vmatprep.subr.mxu0 0.0
    %710 = vmatpush1.msra.mxu0 %v397
    %711 = vmatprep.subr.mxu0 0.0
    %712 = vmatpush1.msra.mxu0 %v394
    %713 = vmatprep.subr.mxu0 0.0
    %714 = vmatpush1.msra.mxu0 %v391
    %715 = vmatprep.subr.mxu0 0.0
    %716 = vmatpush1.msra.mxu0 %v388
    %717 = vmatprep.subr.mxu0 0.0
    %718 = vmatpush1.msra.mxu0 %v385
    %719 = vmatprep.subr.mxu0 0.0
    %720 = vmatpush2.msra.mxu0 0.0
    %721 = vmatprep.subr.mxu0 0.0
    %722 = vmatpush2.msra.mxu0 0.0
    %723 = vmatprep.subr.mxu0 0.0
    %724 = vmatpush2.msra.mxu0 0.0
    %725 = vmatprep.subr.mxu0 0.0
    %726 = vmatpush2.msra.mxu0 0.0
    %727 = vmatprep.subr.mxu0 0.0
    %728 = vmatpush2.msra.mxu0 0.0
    %729 = vmatprep.subr.mxu0 0.0
    %730 = vmatpush2.msra.mxu0 0.0
    %731 = vmatprep.subr.mxu0 0.0
    %732 = vmatpush2.msra.mxu0 0.0
    %733 = vmatprep.subr.mxu0 0.0
    %734 = vmatpush2.msra.mxu0 0.0
    %735 = vmatprep.subr.mxu0 0.0
    %736 = vmatpush2.msra.mxu0 0.0
    %737 = vmatprep.subr.mxu0 0.0
    %738 = vmatpush2.msra.mxu0 0.0
    %739 = vmatprep.subr.mxu0 0.0
    %740 = vmatpush2.msra.mxu0 0.0
    %741 = vmatprep.subr.mxu0 0.0
    %742 = vmatpush2.msra.mxu0 0.0
    %743 = vmatprep.subr.mxu0 0.0
    %744 = vmatpush2.msra.mxu0 0.0
    %745 = vmatprep.subr.mxu0 0.0
    %746 = vmatpush2.msra.mxu0 0.0
    %747 = vmatprep.subr.mxu0 0.0
    %748 = vmatpush2.msra.mxu0 0.0
    %749 = vmatprep.subr.mxu0 0.0
    %750 = vmatpush2.msra.mxu0 0.0
    %751 = vmatprep.mubr.f32.mxu0 0.0
    %752 = vmatmul.mubr.f32.gmra.mxu0 %v609
    %v753 = vpop.f32.mrf.mxu0
    %v754 = vadd.f32 %v444, %v753
    %v755 = vpop.f32.mrf.mxu0
    %756 = vdwg.mxu0
    %v757 = vadd.f32 %v613, %v683
    %v758 = vxor.u32 %v757, 2147483648
    %v759 = vmul.f32 %v758, 1.442695
    %v760 = vpow.pop %v759
    %v761 = vadd.f32 %v760, 1.0
    %v762 = vrcp.pop %v761
    %v763 = vmul.f32 1.0, %v762
    %v764 = vadd.f32 %v614, %v685
    %v765 = vxor.u32 %v764, 2147483648
    %v766 = vmul.f32 %v765, 1.442695
    %v767 = vpow.pop %v766
    %v768 = vadd.f32 %v767, 1.0
    %v769 = vrcp.pop %v768
    %v770 = vmul.f32 1.0, %v769
    %v771 = vmul.f32 %v763, %v754
    %v772 = vadd.f32 %v615, %v771
    %v773 = vtanh.pop %v772
    %v774 = vsub.f32 1.0, %v770
    %v775 = vmul.f32 %v774, %v773
    %v776 = vmul.f32 %v770, %v609
    %v777 = vadd.f32 %v775, %v776
    %s778 = smul.u32 2, 3
    %s779 = smul.addr %s778, 8
    %s780 = scalar_lea.vmem [#allocation2], %s779
    %v781 = vld [vmem:[%s780] sm:$0xff]
    %v782 = vld [vmem:[%s780 + $0x8] sm:$0xff]
    %v783 = vld [vmem:[%s780 + $0x10] sm:$0xff]
    %784 = vmatprep.subr.mxu0 %v429
    %785 = vmatpush1.msra.mxu0 %v428
    %786 = vmatprep.subr.mxu0 %v426
    %787 = vmatpush1.msra.mxu0 %v425
    %788 = vmatprep.subr.mxu0 %v423
    %789 = vmatpush1.msra.mxu0 %v422
    %790 = vmatprep.subr.mxu0 %v420
    %791 = vmatpush1.msra.mxu0 %v419
    %792 = vmatprep.subr.mxu0 %v417
    %793 = vmatpush1.msra.mxu0 %v416
    %794 = vmatprep.subr.mxu0 %v414
    %795 = vmatpush1.msra.mxu0 %v413
    %796 = vmatprep.subr.mxu0 %v411
    %797 = vmatpush1.msra.mxu0 %v410
    %798 = vmatprep.subr.mxu0 %v408
    %799 = vmatpush1.msra.mxu0 %v407
    %800 = vmatprep.subr.mxu0 %v405
    %801 = vmatpush1.msra.mxu0 %v404
    %802 = vmatprep.subr.mxu0 %v402
    %803 = vmatpush1.msra.mxu0 %v401
    %804 = vmatprep.subr.mxu0 %v399
    %805 = vmatpush1.msra.mxu0 %v398
    %806 = vmatprep.subr.mxu0 %v396
    %807 = vmatpush1.msra.mxu0 %v395
    %808 = vmatprep.subr.mxu0 %v393
    %809 = vmatpush1.msra.mxu0 %v392
    %810 = vmatprep.subr.mxu0 %v390
    %811 = vmatpush1.msra.mxu0 %v389
    %812 = vmatprep.subr.mxu0 %v387
    %813 = vmatpush1.msra.mxu0 %v386
    %814 = vmatprep.subr.mxu0 %v384
    %815 = vmatpush1.msra.mxu0 %v383
    %816 = vmatprep.subr.mxu0 0.0
    %817 = vmatpush2.msra.mxu0 0.0
    %818 = vmatprep.subr.mxu0 0.0
    %819 = vmatpush2.msra.mxu0 0.0
    %820 = vmatprep.subr.mxu0 0.0
    %821 = vmatpush2.msra.mxu0 0.0
    %822 = vmatprep.subr.mxu0 0.0
    %823 = vmatpush2.msra.mxu0 0.0
    %824 = vmatprep.subr.mxu0 0.0
    %825 = vmatpush2.msra.mxu0 0.0
    %826 = vmatprep.subr.mxu0 0.0
    %827 = vmatpush2.msra.mxu0 0.0
    %828 = vmatprep.subr.mxu0 0.0
    %829 = vmatpush2.msra.mxu0 0.0
    %830 = vmatprep.subr.mxu0 0.0
    %831 = vmatpush2.msra.mxu0 0.0
    %832 = vmatprep.subr.mxu0 0.0
    %833 = vmatpush2.msra.mxu0 0.0
    %834 = vmatprep.subr.mxu0 0.0
    %835 = vmatpush2.msra.mxu0 0.0
    %836 = vmatprep.subr.mxu0 0.0
    %837 = vmatpush2.msra.mxu0 0.0
    %838 = vmatprep.subr.mxu0 0.0
    %839 = vmatpush2.msra.mxu0 0.0
    %840 = vmatprep.subr.mxu0 0.0
    %841 = vmatpush2.msra.mxu0 0.0
    %842 = vmatprep.subr.mxu0 0.0
    %843 = vmatpush2.msra.mxu0 0.0
    %844 = vmatprep.subr.mxu0 0.0
    %845 = vmatpush2.msra.mxu0 0.0
    %846 = vmatprep.subr.mxu0 0.0
    %847 = vmatpush2.msra.mxu0 0.0
    %848 = vmatprep.mubr.f32.mxu0 0.0
    %849 = vmatmul.mubr.f32.gmra.mxu0 %v777
    %v850 = vpop.f32.mrf.mxu0
    %v851 = vadd.f32 %v436, %v850
    %v852 = vpop.f32.mrf.mxu0
    %v853 = vadd.f32 %v440, %v852
    %854 = vdwg.mxu0
    %855 = vmatprep.subr.mxu0 0.0
    %856 = vmatpush1.msra.mxu0 %v430
    %857 = vmatprep.subr.mxu0 0.0
    %858 = vmatpush1.msra.mxu0 %v427
    %859 = vmatprep.subr.mxu0 0.0
    %860 = vmatpush1.msra.mxu0 %v424
    %861 = vmatprep.subr.mxu0 0.0
    %862 = vmatpush1.msra.mxu0 %v421
    %863 = vmatprep.subr.mxu0 0.0
    %864 = vmatpush1.msra.mxu0 %v418
    %865 = vmatprep.subr.mxu0 0.0
    %866 = vmatpush1.msra.mxu0 %v415
    %867 = vmatprep.subr.mxu0 0.0
    %868 = vmatpush1.msra.mxu0 %v412
    %869 = vmatprep.subr.mxu0 0.0
    %870 = vmatpush1.msra.mxu0 %v409
    %871 = vmatprep.subr.mxu0 0.0
    %872 = vmatpush1.msra.mxu0 %v406
    %873 = vmatprep.subr.mxu0 0.0
    %874 = vmatpush1.msra.mxu0 %v403
    %875 = vmatprep.subr.mxu0 0.0
    %876 = vmatpush1.msra.mxu0 %v400
    %877 = vmatprep.subr.mxu0 0.0
    %878 = vmatpush1.msra.mxu0 %v397
    %879 = vmatprep.subr.mxu0 0.0
    %880 = vmatpush1.msra.mxu0 %v394
    %881 = vmatprep.subr.mxu0 0.0
    %882 = vmatpush1.msra.mxu0 %v391
    %883 = vmatprep.subr.mxu0 0.0
    %884 = vmatpush1.msra.mxu0 %v388
    %885 = vmatprep.subr.mxu0 0.0
    %886 = vmatpush1.msra.mxu0 %v385
    %887 = vmatprep.subr.mxu0 0.0
    %888 = vmatpush2.msra.mxu0 0.0
    %889 = vmatprep.subr.mxu0 0.0
    %890 = vmatpush2.msra.mxu0 0.0
    %891 = vmatprep.subr.mxu0 0.0
    %892 = vmatpush2.msra.mxu0 0.0
    %893 = vmatprep.subr.mxu0 0.0
    %894 = vmatpush2.msra.mxu0 0.0
    %895 = vmatprep.subr.mxu0 0.0
    %896 = vmatpush2.msra.mxu0 0.0
    %897 = vmatprep.subr.mxu0 0.0
    %898 = vmatpush2.msra.mxu0 0.0
    %899 = vmatprep.subr.mxu0 0.0
    %900 = vmatpush2.msra.mxu0 0.0
    %901 = vmatprep.subr.mxu0 0.0
    %902 = vmatpush2.msra.mxu0 0.0
    %903 = vmatprep.subr.mxu0 0.0
    %904 = vmatpush2.msra.mxu0 0.0
    %905 = vmatprep.subr.mxu0 0.0
    %906 = vmatpush2.msra.mxu0 0.0
    %907 = vmatprep.subr.mxu0 0.0
    %908 = vmatpush2.msra.mxu0 0.0
    %909 = vmatprep.subr.mxu0 0.0
    %910 = vmatpush2.msra.mxu0 0.0
    %911 = vmatprep.subr.mxu0 0.0
    %912 = vmatpush2.msra.mxu0 0.0
    %913 = vmatprep.subr.mxu0 0.0
    %914 = vmatpush2.msra.mxu0 0.0
    %915 = vmatprep.subr.mxu0 0.0
    %916 = vmatpush2.msra.mxu0 0.0
    %917 = vmatprep.subr.mxu0 0.0
    %918 = vmatpush2.msra.mxu0 0.0
    %919 = vmatprep.mubr.f32.mxu0 0.0
    %920 = vmatmul.mubr.f32.gmra.mxu0 %v777
    %v921 = vpop.f32.mrf.mxu0
    %v922 = vadd.f32 %v444, %v921
    %v923 = vpop.f32.mrf.mxu0
    %924 = vdwg.mxu0
    %v925 = vadd.f32 %v781, %v851
    %v926 = vxor.u32 %v925, 2147483648
    %v927 = vmul.f32 %v926, 1.442695
    %v928 = vpow.pop %v927
    %v929 = vadd.f32 %v928, 1.0
    %v930 = vrcp.pop %v929
    %v931 = vmul.f32 1.0, %v930
    %v932 = vadd.f32 %v782, %v853
    %v933 = vxor.u32 %v932, 2147483648
    %v934 = vmul.f32 %v933, 1.442695
    %v935 = vpow.pop %v934
    %v936 = vadd.f32 %v935, 1.0
    %v937 = vrcp.pop %v936
    %v938 = vmul.f32 1.0, %v937
    %v939 = vmul.f32 %v931, %v922
    %v940 = vadd.f32 %v783, %v939
    %v941 = vtanh.pop %v940
    %v942 = vsub.f32 1.0, %v938
    %v943 = vmul.f32 %v942, %v941
    %v944 = vmul.f32 %v938, %v777
    %v945 = vadd.f32 %v943, %v944
    %s946 = smul.u32 3, 3
    %s947 = smul.addr %s946, 8
    %s948 = scalar_lea.vmem [#allocation2], %s947
    %v949 = vld [vmem:[%s948] sm:$0xff]
    %v950 = vld [vmem:[%s948 + $0x8] sm:$0xff]
    %v951 = vld [vmem:[%s948 + $0x10] sm:$0xff]
    %952 = vmatprep.subr.mxu0 %v429
    %953 = vmatpush1.msra.mxu0 %v428
    %954 = vmatprep.subr.mxu0 %v426
    %955 = vmatpush1.msra.mxu0 %v425
    %956 = vmatprep.subr.mxu0 %v423
    %957 = vmatpush1.msra.mxu0 %v422
    %958 = vmatprep.subr.mxu0 %v420
    %959 = vmatpush1.msra.mxu0 %v419
    %960 = vmatprep.subr.mxu0 %v417
    %961 = vmatpush1.msra.mxu0 %v416
    %962 = vmatprep.subr.mxu0 %v414
    %963 = vmatpush1.msra.mxu0 %v413
    %964 = vmatprep.subr.mxu0 %v411
    %965 = vmatpush1.msra.mxu0 %v410
    %966 = vmatprep.subr.mxu0 %v408
    %967 = vmatpush1.msra.mxu0 %v407
    %968 = vmatprep.subr.mxu0 %v405
    %969 = vmatpush1.msra.mxu0 %v404
    %970 = vmatprep.subr.mxu0 %v402
    %971 = vmatpush1.msra.mxu0 %v401
    %972 = vmatprep.subr.mxu0 %v399
    %973 = vmatpush1.msra.mxu0 %v398
    %974 = vmatprep.subr.mxu0 %v396
    %975 = vmatpush1.msra.mxu0 %v395
    %976 = vmatprep.subr.mxu0 %v393
    %977 = vmatpush1.msra.mxu0 %v392
    %978 = vmatprep.subr.mxu0 %v390
    %979 = vmatpush1.msra.mxu0 %v389
    %980 = vmatprep.subr.mxu0 %v387
    %981 = vmatpush1.msra.mxu0 %v386
    %982 = vmatprep.subr.mxu0 %v384
    %983 = vmatpush1.msra.mxu0 %v383
    %984 = vmatprep.subr.mxu0 0.0
    %985 = vmatpush2.msra.mxu0 0.0
    %986 = vmatprep.subr.mxu0 0.0
    %987 = vmatpush2.msra.mxu0 0.0
    %988 = vmatprep.subr.mxu0 0.0
    %989 = vmatpush2.msra.mxu0 0.0
    %990 = vmatprep.subr.mxu0 0.0
    %991 = vmatpush2.msra.mxu0 0.0
    %992 = vmatprep.subr.mxu0 0.0
    %993 = vmatpush2.msra.mxu0 0.0
    %994 = vmatprep.subr.mxu0 0.0
    %995 = vmatpush2.msra.mxu0 0.0
    %996 = vmatprep.subr.mxu0 0.0
    %997 = vmatpush2.msra.mxu0 0.0
    %998 = vmatprep.subr.mxu0 0.0
    %999 = vmatpush2.msra.mxu0 0.0
    %1000 = vmatprep.subr.mxu0 0.0
    %1001 = vmatpush2.msra.mxu0 0.0
    %1002 = vmatprep.subr.mxu0 0.0
    %1003 = vmatpush2.msra.mxu0 0.0
    %1004 = vmatprep.subr.mxu0 0.0
    %1005 = vmatpush2.msra.mxu0 0.0
    %1006 = vmatprep.subr.mxu0 0.0
    %1007 = vmatpush2.msra.mxu0 0.0
    %1008 = vmatprep.subr.mxu0 0.0
    %1009 = vmatpush2.msra.mxu0 0.0
    %1010 = vmatprep.subr.mxu0 0.0
    %1011 = vmatpush2.msra.mxu0 0.0
    %1012 = vmatprep.subr.mxu0 0.0
    %1013 = vmatpush2.msra.mxu0 0.0
    %1014 = vmatprep.subr.mxu0 0.0
    %1015 = vmatpush2.msra.mxu0 0.0
    %1016 = vmatprep.mubr.f32.mxu0 0.0
    %1017 = vmatmul.mubr.f32.gmra.mxu0 %v945
    %v1018 = vpop.f32.mrf.mxu0
    %v1019 = vadd.f32 %v436, %v1018
    %v1020 = vpop.f32.mrf.mxu0
    %v1021 = vadd.f32 %v440, %v1020
    %1022 = vdwg.mxu0
    %1023 = vmatprep.subr.mxu0 0.0
    %1024 = vmatpush1.msra.mxu0 %v430
    %1025 = vmatprep.subr.mxu0 0.0
    %1026 = vmatpush1.msra.mxu0 %v427
    %1027 = vmatprep.subr.mxu0 0.0
    %1028 = vmatpush1.msra.mxu0 %v424
    %1029 = vmatprep.subr.mxu0 0.0
    %1030 = vmatpush1.msra.mxu0 %v421
    %1031 = vmatprep.subr.mxu0 0.0
    %1032 = vmatpush1.msra.mxu0 %v418
    %1033 = vmatprep.subr.mxu0 0.0
    %1034 = vmatpush1.msra.mxu0 %v415
    %1035 = vmatprep.subr.mxu0 0.0
    %1036 = vmatpush1.msra.mxu0 %v412
    %1037 = vmatprep.subr.mxu0 0.0
    %1038 = vmatpush1.msra.mxu0 %v409
    %1039 = vmatprep.subr.mxu0 0.0
    %1040 = vmatpush1.msra.mxu0 %v406
    %1041 = vmatprep.subr.mxu0 0.0
    %1042 = vmatpush1.msra.mxu0 %v403
    %1043 = vmatprep.subr.mxu0 0.0
    %1044 = vmatpush1.msra.mxu0 %v400
    %1045 = vmatprep.subr.mxu0 0.0
    %1046 = vmatpush1.msra.mxu0 %v397
    %1047 = vmatprep.subr.mxu0 0.0
    %1048 = vmatpush1.msra.mxu0 %v394
    %1049 = vmatprep.subr.mxu0 0.0
    %1050 = vmatpush1.msra.mxu0 %v391
    %1051 = vmatprep.subr.mxu0 0.0
    %1052 = vmatpush1.msra.mxu0 %v388
    %1053 = vmatprep.subr.mxu0 0.0
    %1054 = vmatpush1.msra.mxu0 %v385
    %1055 = vmatprep.subr.mxu0 0.0
    %1056 = vmatpush2.msra.mxu0 0.0
    %1057 = vmatprep.subr.mxu0 0.0
    %1058 = vmatpush2.msra.mxu0 0.0
    %1059 = vmatprep.subr.mxu0 0.0
    %1060 = vmatpush2.msra.mxu0 0.0
    %1061 = vmatprep.subr.mxu0 0.0
    %1062 = vmatpush2.msra.mxu0 0.0
    %1063 = vmatprep.subr.mxu0 0.0
    %1064 = vmatpush2.msra.mxu0 0.0
    %1065 = vmatprep.subr.mxu0 0.0
    %1066 = vmatpush2.msra.mxu0 0.0
    %1067 = vmatprep.subr.mxu0 0.0
    %1068 = vmatpush2.msra.mxu0 0.0
    %1069 = vmatprep.subr.mxu0 0.0
    %1070 = vmatpush2.msra.mxu0 0.0
    %1071 = vmatprep.subr.mxu0 0.0
    %1072 = vmatpush2.msra.mxu0 0.0
    %1073 = vmatprep.subr.mxu0 0.0
    %1074 = vmatpush2.msra.mxu0 0.0
    %1075 = vmatprep.subr.mxu0 0.0
    %1076 = vmatpush2.msra.mxu0 0.0
    %1077 = vmatprep.subr.mxu0 0.0
    %1078 = vmatpush2.msra.mxu0 0.0
    %1079 = vmatprep.subr.mxu0 0.0
    %1080 = vmatpush2.msra.mxu0 0.0
    %1081 = vmatprep.subr.mxu0 0.0
    %1082 = vmatpush2.msra.mxu0 0.0
    %1083 = vmatprep.subr.mxu0 0.0
    %1084 = vmatpush2.msra.mxu0 0.0
    %1085 = vmatprep.subr.mxu0 0.0
    %1086 = vmatpush2.msra.mxu0 0.0
    %1087 = vmatprep.mubr.f32.mxu0 0.0
    %1088 = vmatmul.mubr.f32.gmra.mxu0 %v945
    %v1089 = vpop.f32.mrf.mxu0
    %v1090 = vadd.f32 %v444, %v1089
    %v1091 = vpop.f32.mrf.mxu0
    %1092 = vdwg.mxu0
    %v1093 = vadd.f32 %v949, %v1019
    %v1094 = vxor.u32 %v1093, 2147483648
    %v1095 = vmul.f32 %v1094, 1.442695
    %v1096 = vpow.pop %v1095
    %v1097 = vadd.f32 %v1096, 1.0
    %v1098 = vrcp.pop %v1097
    %v1099 = vmul.f32 1.0, %v1098
    %v1100 = vadd.f32 %v950, %v1021
    %v1101 = vxor.u32 %v1100, 2147483648
    %v1102 = vmul.f32 %v1101, 1.442695
    %v1103 = vpow.pop %v1102
    %v1104 = vadd.f32 %v1103, 1.0
    %v1105 = vrcp.pop %v1104
    %v1106 = vmul.f32 1.0, %v1105
    %v1107 = vmul.f32 %v1099, %v1090
    %v1108 = vadd.f32 %v951, %v1107
    %v1109 = vtanh.pop %v1108
    %v1110 = vsub.f32 1.0, %v1106
    %v1111 = vmul.f32 %v1110, %v1109
    %v1112 = vmul.f32 %v1106, %v945
    %v1113 = vadd.f32 %v1111, %v1112
    %s1114 = smul.u32 4, 3
    %s1115 = smul.addr %s1114, 8
    %s1116 = scalar_lea.vmem [#allocation2], %s1115
    %v1117 = vld [vmem:[%s1116] sm:$0xff]
    %v1118 = vld [vmem:[%s1116 + $0x8] sm:$0xff]
    %v1119 = vld [vmem:[%s1116 + $0x10] sm:$0xff]
    %1120 = vmatprep.subr.mxu0 %v429
    %1121 = vmatpush1.msra.mxu0 %v428
    %1122 = vmatprep.subr.mxu0 %v426
    %1123 = vmatpush1.msra.mxu0 %v425
    %1124 = vmatprep.subr.mxu0 %v423
    %1125 = vmatpush1.msra.mxu0 %v422
    %1126 = vmatprep.subr.mxu0 %v420
    %1127 = vmatpush1.msra.mxu0 %v419
    %1128 = vmatprep.subr.mxu0 %v417
    %1129 = vmatpush1.msra.mxu0 %v416
    %1130 = vmatprep.subr.mxu0 %v414
    %1131 = vmatpush1.msra.mxu0 %v413
    %1132 = vmatprep.subr.mxu0 %v411
    %1133 = vmatpush1.msra.mxu0 %v410
    %1134 = vmatprep.subr.mxu0 %v408
    %1135 = vmatpush1.msra.mxu0 %v407
    %1136 = vmatprep.subr.mxu0 %v405
    %1137 = vmatpush1.msra.mxu0 %v404
    %1138 = vmatprep.subr.mxu0 %v402
    %1139 = vmatpush1.msra.mxu0 %v401
    %1140 = vmatprep.subr.mxu0 %v399
    %1141 = vmatpush1.msra.mxu0 %v398
    %1142 = vmatprep.subr.mxu0 %v396
    %1143 = vmatpush1.msra.mxu0 %v395
    %1144 = vmatprep.subr.mxu0 %v393
    %1145 = vmatpush1.msra.mxu0 %v392
    %1146 = vmatprep.subr.mxu0 %v390
    %1147 = vmatpush1.msra.mxu0 %v389
    %1148 = vmatprep.subr.mxu0 %v387
    %1149 = vmatpush1.msra.mxu0 %v386
    %1150 = vmatprep.subr.mxu0 %v384
    %1151 = vmatpush1.msra.mxu0 %v383
    %1152 = vmatprep.subr.mxu0 0.0
    %1153 = vmatpush2.msra.mxu0 0.0
    %1154 = vmatprep.subr.mxu0 0.0
    %1155 = vmatpush2.msra.mxu0 0.0
    %1156 = vmatprep.subr.mxu0 0.0
    %1157 = vmatpush2.msra.mxu0 0.0
    %1158 = vmatprep.subr.mxu0 0.0
    %1159 = vmatpush2.msra.mxu0 0.0
    %1160 = vmatprep.subr.mxu0 0.0
    %1161 = vmatpush2.msra.mxu0 0.0
    %1162 = vmatprep.subr.mxu0 0.0
    %1163 = vmatpush2.msra.mxu0 0.0
    %1164 = vmatprep.subr.mxu0 0.0
    %1165 = vmatpush2.msra.mxu0 0.0
    %1166 = vmatprep.subr.mxu0 0.0
    %1167 = vmatpush2.msra.mxu0 0.0
    %1168 = vmatprep.subr.mxu0 0.0
    %1169 = vmatpush2.msra.mxu0 0.0
    %1170 = vmatprep.subr.mxu0 0.0
    %1171 = vmatpush2.msra.mxu0 0.0
    %1172 = vmatprep.subr.mxu0 0.0
    %1173 = vmatpush2.msra.mxu0 0.0
    %1174 = vmatprep.subr.mxu0 0.0
    %1175 = vmatpush2.msra.mxu0 0.0
    %1176 = vmatprep.subr.mxu0 0.0
    %1177 = vmatpush2.msra.mxu0 0.0
    %1178 = vmatprep.subr.mxu0 0.0
    %1179 = vmatpush2.msra.mxu0 0.0
    %1180 = vmatprep.subr.mxu0 0.0
    %1181 = vmatpush2.msra.mxu0 0.0
    %1182 = vmatprep.subr.mxu0 0.0
    %1183 = vmatpush2.msra.mxu0 0.0
    %1184 = vmatprep.mubr.f32.mxu0 0.0
    %1185 = vmatmul.mubr.f32.gmra.mxu0 %v1113
    %v1186 = vpop.f32.mrf.mxu0
    %v1187 = vadd.f32 %v436, %v1186
    %v1188 = vpop.f32.mrf.mxu0
    %v1189 = vadd.f32 %v440, %v1188
    %1190 = vdwg.mxu0
    %1191 = vmatprep.subr.mxu0 0.0
    %1192 = vmatpush1.msra.mxu0 %v430
    %1193 = vmatprep.subr.mxu0 0.0
    %1194 = vmatpush1.msra.mxu0 %v427
    %1195 = vmatprep.subr.mxu0 0.0
    %1196 = vmatpush1.msra.mxu0 %v424
    %1197 = vmatprep.subr.mxu0 0.0
    %1198 = vmatpush1.msra.mxu0 %v421
    %1199 = vmatprep.subr.mxu0 0.0
    %1200 = vmatpush1.msra.mxu0 %v418
    %1201 = vmatprep.subr.mxu0 0.0
    %1202 = vmatpush1.msra.mxu0 %v415
    %1203 = vmatprep.subr.mxu0 0.0
    %1204 = vmatpush1.msra.mxu0 %v412
    %1205 = vmatprep.subr.mxu0 0.0
    %1206 = vmatpush1.msra.mxu0 %v409
    %1207 = vmatprep.subr.mxu0 0.0
    %1208 = vmatpush1.msra.mxu0 %v406
    %1209 = vmatprep.subr.mxu0 0.0
    %1210 = vmatpush1.msra.mxu0 %v403
    %1211 = vmatprep.subr.mxu0 0.0
    %1212 = vmatpush1.msra.mxu0 %v400
    %1213 = vmatprep.subr.mxu0 0.0
    %1214 = vmatpush1.msra.mxu0 %v397
    %1215 = vmatprep.subr.mxu0 0.0
    %1216 = vmatpush1.msra.mxu0 %v394
    %1217 = vmatprep.subr.mxu0 0.0
    %1218 = vmatpush1.msra.mxu0 %v391
    %1219 = vmatprep.subr.mxu0 0.0
    %1220 = vmatpush1.msra.mxu0 %v388
    %1221 = vmatprep.subr.mxu0 0.0
    %1222 = vmatpush1.msra.mxu0 %v385
    %1223 = vmatprep.subr.mxu0 0.0
    %1224 = vmatpush2.msra.mxu0 0.0
    %1225 = vmatprep.subr.mxu0 0.0
    %1226 = vmatpush2.msra.mxu0 0.0
    %1227 = vmatprep.subr.mxu0 0.0
    %1228 = vmatpush2.msra.mxu0 0.0
    %1229 = vmatprep.subr.mxu0 0.0
    %1230 = vmatpush2.msra.mxu0 0.0
    %1231 = vmatprep.subr.mxu0 0.0
    %1232 = vmatpush2.msra.mxu0 0.0
    %1233 = vmatprep.subr.mxu0 0.0
    %1234 = vmatpush2.msra.mxu0 0.0
    %1235 = vmatprep.subr.mxu0 0.0
    %1236 = vmatpush2.msra.mxu0 0.0
    %1237 = vmatprep.subr.mxu0 0.0
    %1238 = vmatpush2.msra.mxu0 0.0
    %1239 = vmatprep.subr.mxu0 0.0
    %1240 = vmatpush2.msra.mxu0 0.0
    %1241 = vmatprep.subr.mxu0 0.0
    %1242 = vmatpush2.msra.mxu0 0.0
    %1243 = vmatprep.subr.mxu0 0.0
    %1244 = vmatpush2.msra.mxu0 0.0
    %1245 = vmatprep.subr.mxu0 0.0
    %1246 = vmatpush2.msra.mxu0 0.0
    %1247 = vmatprep.subr.mxu0 0.0
    %1248 = vmatpush2.msra.mxu0 0.0
    %1249 = vmatprep.subr.mxu0 0.0
    %1250 = vmatpush2.msra.mxu0 0.0
    %1251 = vmatprep.subr.mxu0 0.0
    %1252 = vmatpush2.msra.mxu0 0.0
    %1253 = vmatprep.subr.mxu0 0.0
    %1254 = vmatpush2.msra.mxu0 0.0
    %1255 = vmatprep.mubr.f32.mxu0 0.0
    %1256 = vmatmul.mubr.f32.gmra.mxu0 %v1113
    %v1257 = vpop.f32.mrf.mxu0
    %v1258 = vadd.f32 %v444, %v1257
    %v1259 = vpop.f32.mrf.mxu0
    %1260 = vdwg.mxu0
    %v1261 = vadd.f32 %v1117, %v1187
    %v1262 = vxor.u32 %v1261, 2147483648
    %v1263 = vmul.f32 %v1262, 1.442695
    %v1264 = vpow.pop %v1263
    %v1265 = vadd.f32 %v1264, 1.0
    %v1266 = vrcp.pop %v1265
    %v1267 = vmul.f32 1.0, %v1266
    %v1268 = vadd.f32 %v1118, %v1189
    %v1269 = vxor.u32 %v1268, 2147483648
    %v1270 = vmul.f32 %v1269, 1.442695
    %v1271 = vpow.pop %v1270
    %v1272 = vadd.f32 %v1271, 1.0
    %v1273 = vrcp.pop %v1272
    %v1274 = vmul.f32 1.0, %v1273
    %v1275 = vmul.f32 %v1267, %v1258
    %v1276 = vadd.f32 %v1119, %v1275
    %v1277 = vtanh.pop %v1276
    %v1278 = vsub.f32 1.0, %v1274
    %v1279 = vmul.f32 %v1278, %v1277
    %v1280 = vmul.f32 %v1274, %v1113
    %v1281 = vadd.f32 %v1279, %v1280
    %s1282 = smul.u32 5, 3
    %s1283 = smul.addr %s1282, 8
    %s1284 = scalar_lea.vmem [#allocation2], %s1283
    %v1285 = vld [vmem:[%s1284] sm:$0xff]
    %v1286 = vld [vmem:[%s1284 + $0x8] sm:$0xff]
    %v1287 = vld [vmem:[%s1284 + $0x10] sm:$0xff]
    %1288 = vmatprep.subr.mxu0 %v429
    %1289 = vmatpush1.msra.mxu0 %v428
    %1290 = vmatprep.subr.mxu0 %v426
    %1291 = vmatpush1.msra.mxu0 %v425
    %1292 = vmatprep.subr.mxu0 %v423
    %1293 = vmatpush1.msra.mxu0 %v422
    %1294 = vmatprep.subr.mxu0 %v420
    %1295 = vmatpush1.msra.mxu0 %v419
    %1296 = vmatprep.subr.mxu0 %v417
    %1297 = vmatpush1.msra.mxu0 %v416
    %1298 = vmatprep.subr.mxu0 %v414
    %1299 = vmatpush1.msra.mxu0 %v413
    %1300 = vmatprep.subr.mxu0 %v411
    %1301 = vmatpush1.msra.mxu0 %v410
    %1302 = vmatprep.subr.mxu0 %v408
    %1303 = vmatpush1.msra.mxu0 %v407
    %1304 = vmatprep.subr.mxu0 %v405
    %1305 = vmatpush1.msra.mxu0 %v404
    %1306 = vmatprep.subr.mxu0 %v402
    %1307 = vmatpush1.msra.mxu0 %v401
    %1308 = vmatprep.subr.mxu0 %v399
    %1309 = vmatpush1.msra.mxu0 %v398
    %1310 = vmatprep.subr.mxu0 %v396
    %1311 = vmatpush1.msra.mxu0 %v395
    %1312 = vmatprep.subr.mxu0 %v393
    %1313 = vmatpush1.msra.mxu0 %v392
    %1314 = vmatprep.subr.mxu0 %v390
    %1315 = vmatpush1.msra.mxu0 %v389
    %1316 = vmatprep.subr.mxu0 %v387
    %1317 = vmatpush1.msra.mxu0 %v386
    %1318 = vmatprep.subr.mxu0 %v384
    %1319 = vmatpush1.msra.mxu0 %v383
    %1320 = vmatprep.subr.mxu0 0.0
    %1321 = vmatpush2.msra.mxu0 0.0
    %1322 = vmatprep.subr.mxu0 0.0
    %1323 = vmatpush2.msra.mxu0 0.0
    %1324 = vmatprep.subr.mxu0 0.0
    %1325 = vmatpush2.msra.mxu0 0.0
    %1326 = vmatprep.subr.mxu0 0.0
    %1327 = vmatpush2.msra.mxu0 0.0
    %1328 = vmatprep.subr.mxu0 0.0
    %1329 = vmatpush2.msra.mxu0 0.0
    %1330 = vmatprep.subr.mxu0 0.0
    %1331 = vmatpush2.msra.mxu0 0.0
    %1332 = vmatprep.subr.mxu0 0.0
    %1333 = vmatpush2.msra.mxu0 0.0
    %1334 = vmatprep.subr.mxu0 0.0
    %1335 = vmatpush2.msra.mxu0 0.0
    %1336 = vmatprep.subr.mxu0 0.0
    %1337 = vmatpush2.msra.mxu0 0.0
    %1338 = vmatprep.subr.mxu0 0.0
    %1339 = vmatpush2.msra.mxu0 0.0
    %1340 = vmatprep.subr.mxu0 0.0
    %1341 = vmatpush2.msra.mxu0 0.0
    %1342 = vmatprep.subr.mxu0 0.0
    %1343 = vmatpush2.msra.mxu0 0.0
    %1344 = vmatprep.subr.mxu0 0.0
    %1345 = vmatpush2.msra.mxu0 0.0
    %1346 = vmatprep.subr.mxu0 0.0
    %1347 = vmatpush2.msra.mxu0 0.0
    %1348 = vmatprep.subr.mxu0 0.0
    %1349 = vmatpush2.msra.mxu0 0.0
    %1350 = vmatprep.subr.mxu0 0.0
    %1351 = vmatpush2.msra.mxu0 0.0
    %1352 = vmatprep.mubr.f32.mxu0 0.0
    %1353 = vmatmul.mubr.f32.gmra.mxu0 %v1281
    %v1354 = vpop.f32.mrf.mxu0
    %v1355 = vadd.f32 %v436, %v1354
    %v1356 = vpop.f32.mrf.mxu0
    %v1357 = vadd.f32 %v440, %v1356
    %1358 = vdwg.mxu0
    %1359 = vmatprep.subr.mxu0 0.0
    %1360 = vmatpush1.msra.mxu0 %v430
    %1361 = vmatprep.subr.mxu0 0.0
    %1362 = vmatpush1.msra.mxu0 %v427
    %1363 = vmatprep.subr.mxu0 0.0
    %1364 = vmatpush1.msra.mxu0 %v424
    %1365 = vmatprep.subr.mxu0 0.0
    %1366 = vmatpush1.msra.mxu0 %v421
    %1367 = vmatprep.subr.mxu0 0.0
    %1368 = vmatpush1.msra.mxu0 %v418
    %1369 = vmatprep.subr.mxu0 0.0
    %1370 = vmatpush1.msra.mxu0 %v415
    %1371 = vmatprep.subr.mxu0 0.0
    %1372 = vmatpush1.msra.mxu0 %v412
    %1373 = vmatprep.subr.mxu0 0.0
    %1374 = vmatpush1.msra.mxu0 %v409
    %1375 = vmatprep.subr.mxu0 0.0
    %1376 = vmatpush1.msra.mxu0 %v406
    %1377 = vmatprep.subr.mxu0 0.0
    %1378 = vmatpush1.msra.mxu0 %v403
    %1379 = vmatprep.subr.mxu0 0.0
    %1380 = vmatpush1.msra.mxu0 %v400
    %1381 = vmatprep.subr.mxu0 0.0
    %1382 = vmatpush1.msra.mxu0 %v397
    %1383 = vmatprep.subr.mxu0 0.0
    %1384 = vmatpush1.msra.mxu0 %v394
    %1385 = vmatprep.subr.mxu0 0.0
    %1386 = vmatpush1.msra.mxu0 %v391
    %1387 = vmatprep.subr.mxu0 0.0
    %1388 = vmatpush1.msra.mxu0 %v388
    %1389 = vmatprep.subr.mxu0 0.0
    %1390 = vmatpush1.msra.mxu0 %v385
    %1391 = vmatprep.subr.mxu0 0.0
    %1392 = vmatpush2.msra.mxu0 0.0
    %1393 = vmatprep.subr.mxu0 0.0
    %1394 = vmatpush2.msra.mxu0 0.0
    %1395 = vmatprep.subr.mxu0 0.0
    %1396 = vmatpush2.msra.mxu0 0.0
    %1397 = vmatprep.subr.mxu0 0.0
    %1398 = vmatpush2.msra.mxu0 0.0
    %1399 = vmatprep.subr.mxu0 0.0
    %1400 = vmatpush2.msra.mxu0 0.0
    %1401 = vmatprep.subr.mxu0 0.0
    %1402 = vmatpush2.msra.mxu0 0.0
    %1403 = vmatprep.subr.mxu0 0.0
    %1404 = vmatpush2.msra.mxu0 0.0
    %1405 = vmatprep.subr.mxu0 0.0
    %1406 = vmatpush2.msra.mxu0 0.0
    %1407 = vmatprep.subr.mxu0 0.0
    %1408 = vmatpush2.msra.mxu0 0.0
    %1409 = vmatprep.subr.mxu0 0.0
    %1410 = vmatpush2.msra.mxu0 0.0
    %1411 = vmatprep.subr.mxu0 0.0
    %1412 = vmatpush2.msra.mxu0 0.0
    %1413 = vmatprep.subr.mxu0 0.0
    %1414 = vmatpush2.msra.mxu0 0.0
    %1415 = vmatprep.subr.mxu0 0.0
    %1416 = vmatpush2.msra.mxu0 0.0
    %1417 = vmatprep.subr.mxu0 0.0
    %1418 = vmatpush2.msra.mxu0 0.0
    %1419 = vmatprep.subr.mxu0 0.0
    %1420 = vmatpush2.msra.mxu0 0.0
    %1421 = vmatprep.subr.mxu0 0.0
    %1422 = vmatpush2.msra.mxu0 0.0
    %1423 = vmatprep.mubr.f32.mxu0 0.0
    %1424 = vmatmul.mubr.f32.gmra.mxu0 %v1281
    %v1425 = vpop.f32.mrf.mxu0
    %v1426 = vadd.f32 %v444, %v1425
    %v1427 = vpop.f32.mrf.mxu0
    %1428 = vdwg.mxu0
    %v1429 = vadd.f32 %v1285, %v1355
    %v1430 = vxor.u32 %v1429, 2147483648
    %v1431 = vmul.f32 %v1430, 1.442695
    %v1432 = vpow.pop %v1431
    %v1433 = vadd.f32 %v1432, 1.0
    %v1434 = vrcp.pop %v1433
    %v1435 = vmul.f32 1.0, %v1434
    %v1436 = vadd.f32 %v1286, %v1357
    %v1437 = vxor.u32 %v1436, 2147483648
    %v1438 = vmul.f32 %v1437, 1.442695
    %v1439 = vpow.pop %v1438
    %v1440 = vadd.f32 %v1439, 1.0
    %v1441 = vrcp.pop %v1440
    %v1442 = vmul.f32 1.0, %v1441
    %v1443 = vmul.f32 %v1435, %v1426
    %v1444 = vadd.f32 %v1287, %v1443
    %v1445 = vtanh.pop %v1444
    %v1446 = vsub.f32 1.0, %v1442
    %v1447 = vmul.f32 %v1446, %v1445
    %v1448 = vmul.f32 %v1442, %v1281
    %v1449 = vadd.f32 %v1447, %v1448
    %s1450 = smul.u32 6, 3
    %s1451 = smul.addr %s1450, 8
    %s1452 = scalar_lea.vmem [#allocation2], %s1451
    %v1453 = vld [vmem:[%s1452] sm:$0xff]
    %v1454 = vld [vmem:[%s1452 + $0x8] sm:$0xff]
    %v1455 = vld [vmem:[%s1452 + $0x10] sm:$0xff]
    %1456 = vmatprep.subr.mxu0 %v429
    %1457 = vmatpush1.msra.mxu0 %v428
    %1458 = vmatprep.subr.mxu0 %v426
    %1459 = vmatpush1.msra.mxu0 %v425
    %1460 = vmatprep.subr.mxu0 %v423
    %1461 = vmatpush1.msra.mxu0 %v422
    %1462 = vmatprep.subr.mxu0 %v420
    %1463 = vmatpush1.msra.mxu0 %v419
    %1464 = vmatprep.subr.mxu0 %v417
    %1465 = vmatpush1.msra.mxu0 %v416
    %1466 = vmatprep.subr.mxu0 %v414
    %1467 = vmatpush1.msra.mxu0 %v413
    %1468 = vmatprep.subr.mxu0 %v411
    %1469 = vmatpush1.msra.mxu0 %v410
    %1470 = vmatprep.subr.mxu0 %v408
    %1471 = vmatpush1.msra.mxu0 %v407
    %1472 = vmatprep.subr.mxu0 %v405
    %1473 = vmatpush1.msra.mxu0 %v404
    %1474 = vmatprep.subr.mxu0 %v402
    %1475 = vmatpush1.msra.mxu0 %v401
    %1476 = vmatprep.subr.mxu0 %v399
    %1477 = vmatpush1.msra.mxu0 %v398
    %1478 = vmatprep.subr.mxu0 %v396
    %1479 = vmatpush1.msra.mxu0 %v395
    %1480 = vmatprep.subr.mxu0 %v393
    %1481 = vmatpush1.msra.mxu0 %v392
    %1482 = vmatprep.subr.mxu0 %v390
    %1483 = vmatpush1.msra.mxu0 %v389
    %1484 = vmatprep.subr.mxu0 %v387
    %1485 = vmatpush1.msra.mxu0 %v386
    %1486 = vmatprep.subr.mxu0 %v384
    %1487 = vmatpush1.msra.mxu0 %v383
    %1488 = vmatprep.subr.mxu0 0.0
    %1489 = vmatpush2.msra.mxu0 0.0
    %1490 = vmatprep.subr.mxu0 0.0
    %1491 = vmatpush2.msra.mxu0 0.0
    %1492 = vmatprep.subr.mxu0 0.0
    %1493 = vmatpush2.msra.mxu0 0.0
    %1494 = vmatprep.subr.mxu0 0.0
    %1495 = vmatpush2.msra.mxu0 0.0
    %1496 = vmatprep.subr.mxu0 0.0
    %1497 = vmatpush2.msra.mxu0 0.0
    %1498 = vmatprep.subr.mxu0 0.0
    %1499 = vmatpush2.msra.mxu0 0.0
    %1500 = vmatprep.subr.mxu0 0.0
    %1501 = vmatpush2.msra.mxu0 0.0
    %1502 = vmatprep.subr.mxu0 0.0
    %1503 = vmatpush2.msra.mxu0 0.0
    %1504 = vmatprep.subr.mxu0 0.0
    %1505 = vmatpush2.msra.mxu0 0.0
    %1506 = vmatprep.subr.mxu0 0.0
    %1507 = vmatpush2.msra.mxu0 0.0
    %1508 = vmatprep.subr.mxu0 0.0
    %1509 = vmatpush2.msra.mxu0 0.0
    %1510 = vmatprep.subr.mxu0 0.0
    %1511 = vmatpush2.msra.mxu0 0.0
    %1512 = vmatprep.subr.mxu0 0.0
    %1513 = vmatpush2.msra.mxu0 0.0
    %1514 = vmatprep.subr.mxu0 0.0
    %1515 = vmatpush2.msra.mxu0 0.0
    %1516 = vmatprep.subr.mxu0 0.0
    %1517 = vmatpush2.msra.mxu0 0.0
    %1518 = vmatprep.subr.mxu0 0.0
    %1519 = vmatpush2.msra.mxu0 0.0
    %1520 = vmatprep.mubr.f32.mxu0 0.0
    %1521 = vmatmul.mubr.f32.gmra.mxu0 %v1449
    %v1522 = vpop.f32.mrf.mxu0
    %v1523 = vadd.f32 %v436, %v1522
    %v1524 = vpop.f32.mrf.mxu0
    %v1525 = vadd.f32 %v440, %v1524
    %1526 = vdwg.mxu0
    %1527 = vmatprep.subr.mxu0 0.0
    %1528 = vmatpush1.msra.mxu0 %v430
    %1529 = vmatprep.subr.mxu0 0.0
    %1530 = vmatpush1.msra.mxu0 %v427
    %1531 = vmatprep.subr.mxu0 0.0
    %1532 = vmatpush1.msra.mxu0 %v424
    %1533 = vmatprep.subr.mxu0 0.0
    %1534 = vmatpush1.msra.mxu0 %v421
    %1535 = vmatprep.subr.mxu0 0.0
    %1536 = vmatpush1.msra.mxu0 %v418
    %1537 = vmatprep.subr.mxu0 0.0
    %1538 = vmatpush1.msra.mxu0 %v415
    %1539 = vmatprep.subr.mxu0 0.0
    %1540 = vmatpush1.msra.mxu0 %v412
    %1541 = vmatprep.subr.mxu0 0.0
    %1542 = vmatpush1.msra.mxu0 %v409
    %1543 = vmatprep.subr.mxu0 0.0
    %1544 = vmatpush1.msra.mxu0 %v406
    %1545 = vmatprep.subr.mxu0 0.0
    %1546 = vmatpush1.msra.mxu0 %v403
    %1547 = vmatprep.subr.mxu0 0.0
    %1548 = vmatpush1.msra.mxu0 %v400
    %1549 = vmatprep.subr.mxu0 0.0
    %1550 = vmatpush1.msra.mxu0 %v397
    %1551 = vmatprep.subr.mxu0 0.0
    %1552 = vmatpush1.msra.mxu0 %v394
    %1553 = vmatprep.subr.mxu0 0.0
    %1554 = vmatpush1.msra.mxu0 %v391
    %1555 = vmatprep.subr.mxu0 0.0
    %1556 = vmatpush1.msra.mxu0 %v388
    %1557 = vmatprep.subr.mxu0 0.0
    %1558 = vmatpush1.msra.mxu0 %v385
    %1559 = vmatprep.subr.mxu0 0.0
    %1560 = vmatpush2.msra.mxu0 0.0
    %1561 = vmatprep.subr.mxu0 0.0
    %1562 = vmatpush2.msra.mxu0 0.0
    %1563 = vmatprep.subr.mxu0 0.0
    %1564 = vmatpush2.msra.mxu0 0.0
    %1565 = vmatprep.subr.mxu0 0.0
    %1566 = vmatpush2.msra.mxu0 0.0
    %1567 = vmatprep.subr.mxu0 0.0
    %1568 = vmatpush2.msra.mxu0 0.0
    %1569 = vmatprep.subr.mxu0 0.0
    %1570 = vmatpush2.msra.mxu0 0.0
    %1571 = vmatprep.subr.mxu0 0.0
    %1572 = vmatpush2.msra.mxu0 0.0
    %1573 = vmatprep.subr.mxu0 0.0
    %1574 = vmatpush2.msra.mxu0 0.0
    %1575 = vmatprep.subr.mxu0 0.0
    %1576 = vmatpush2.msra.mxu0 0.0
    %1577 = vmatprep.subr.mxu0 0.0
    %1578 = vmatpush2.msra.mxu0 0.0
    %1579 = vmatprep.subr.mxu0 0.0
    %1580 = vmatpush2.msra.mxu0 0.0
    %1581 = vmatprep.subr.mxu0 0.0
    %1582 = vmatpush2.msra.mxu0 0.0
    %1583 = vmatprep.subr.mxu0 0.0
    %1584 = vmatpush2.msra.mxu0 0.0
    %1585 = vmatprep.subr.mxu0 0.0
    %1586 = vmatpush2.msra.mxu0 0.0
    %1587 = vmatprep.subr.mxu0 0.0
    %1588 = vmatpush2.msra.mxu0 0.0
    %1589 = vmatprep.subr.mxu0 0.0
    %1590 = vmatpush2.msra.mxu0 0.0
    %1591 = vmatprep.mubr.f32.mxu0 0.0
    %1592 = vmatmul.mubr.f32.gmra.mxu0 %v1449
    %v1593 = vpop.f32.mrf.mxu0
    %v1594 = vadd.f32 %v444, %v1593
    %v1595 = vpop.f32.mrf.mxu0
    %1596 = vdwg.mxu0
    %v1597 = vadd.f32 %v1453, %v1523
    %v1598 = vxor.u32 %v1597, 2147483648
    %v1599 = vmul.f32 %v1598, 1.442695
    %v1600 = vpow.pop %v1599
    %v1601 = vadd.f32 %v1600, 1.0
    %v1602 = vrcp.pop %v1601
    %v1603 = vmul.f32 1.0, %v1602
    %v1604 = vadd.f32 %v1454, %v1525
    %v1605 = vxor.u32 %v1604, 2147483648
    %v1606 = vmul.f32 %v1605, 1.442695
    %v1607 = vpow.pop %v1606
    %v1608 = vadd.f32 %v1607, 1.0
    %v1609 = vrcp.pop %v1608
    %v1610 = vmul.f32 1.0, %v1609
    %v1611 = vmul.f32 %v1603, %v1594
    %v1612 = vadd.f32 %v1455, %v1611
    %v1613 = vtanh.pop %v1612
    %v1614 = vsub.f32 1.0, %v1610
    %v1615 = vmul.f32 %v1614, %v1613
    %v1616 = vmul.f32 %v1610, %v1449
    %v1617 = vadd.f32 %v1615, %v1616
    %s1618 = smul.u32 7, 3
    %s1619 = smul.addr %s1618, 8
    %s1620 = scalar_lea.vmem [#allocation2], %s1619
    %v1621 = vld [vmem:[%s1620] sm:$0xff]
    %v1622 = vld [vmem:[%s1620 + $0x8] sm:$0xff]
    %v1623 = vld [vmem:[%s1620 + $0x10] sm:$0xff]
    %1624 = vmatprep.subr.mxu0 %v429
    %1625 = vmatpush1.msra.mxu0 %v428
    %1626 = vmatprep.subr.mxu0 %v426
    %1627 = vmatpush1.msra.mxu0 %v425
    %1628 = vmatprep.subr.mxu0 %v423
    %1629 = vmatpush1.msra.mxu0 %v422
    %1630 = vmatprep.subr.mxu0 %v420
    %1631 = vmatpush1.msra.mxu0 %v419
    %1632 = vmatprep.subr.mxu0 %v417
    %1633 = vmatpush1.msra.mxu0 %v416
    %1634 = vmatprep.subr.mxu0 %v414
    %1635 = vmatpush1.msra.mxu0 %v413
    %1636 = vmatprep.subr.mxu0 %v411
    %1637 = vmatpush1.msra.mxu0 %v410
    %1638 = vmatprep.subr.mxu0 %v408
    %1639 = vmatpush1.msra.mxu0 %v407
    %1640 = vmatprep.subr.mxu0 %v405
    %1641 = vmatpush1.msra.mxu0 %v404
    %1642 = vmatprep.subr.mxu0 %v402
    %1643 = vmatpush1.msra.mxu0 %v401
    %1644 = vmatprep.subr.mxu0 %v399
    %1645 = vmatpush1.msra.mxu0 %v398
    %1646 = vmatprep.subr.mxu0 %v396
    %1647 = vmatpush1.msra.mxu0 %v395
    %1648 = vmatprep.subr.mxu0 %v393
    %1649 = vmatpush1.msra.mxu0 %v392
    %1650 = vmatprep.subr.mxu0 %v390
    %1651 = vmatpush1.msra.mxu0 %v389
    %1652 = vmatprep.subr.mxu0 %v387
    %1653 = vmatpush1.msra.mxu0 %v386
    %1654 = vmatprep.subr.mxu0 %v384
    %1655 = vmatpush1.msra.mxu0 %v383
    %1656 = vmatprep.subr.mxu0 0.0
    %1657 = vmatpush2.msra.mxu0 0.0
    %1658 = vmatprep.subr.mxu0 0.0
    %1659 = vmatpush2.msra.mxu0 0.0
    %1660 = vmatprep.subr.mxu0 0.0
    %1661 = vmatpush2.msra.mxu0 0.0
    %1662 = vmatprep.subr.mxu0 0.0
    %1663 = vmatpush2.msra.mxu0 0.0
    %1664 = vmatprep.subr.mxu0 0.0
    %1665 = vmatpush2.msra.mxu0 0.0
    %1666 = vmatprep.subr.mxu0 0.0
    %1667 = vmatpush2.msra.mxu0 0.0
    %1668 = vmatprep.subr.mxu0 0.0
    %1669 = vmatpush2.msra.mxu0 0.0
    %1670 = vmatprep.subr.mxu0 0.0
    %1671 = vmatpush2.msra.mxu0 0.0
    %1672 = vmatprep.subr.mxu0 0.0
    %1673 = vmatpush2.msra.mxu0 0.0
    %1674 = vmatprep.subr.mxu0 0.0
    %1675 = vmatpush2.msra.mxu0 0.0
    %1676 = vmatprep.subr.mxu0 0.0
    %1677 = vmatpush2.msra.mxu0 0.0
    %1678 = vmatprep.subr.mxu0 0.0
    %1679 = vmatpush2.msra.mxu0 0.0
    %1680 = vmatprep.subr.mxu0 0.0
    %1681 = vmatpush2.msra.mxu0 0.0
    %1682 = vmatprep.subr.mxu0 0.0
    %1683 = vmatpush2.msra.mxu0 0.0
    %1684 = vmatprep.subr.mxu0 0.0
    %1685 = vmatpush2.msra.mxu0 0.0
    %1686 = vmatprep.subr.mxu0 0.0
    %1687 = vmatpush2.msra.mxu0 0.0
    %1688 = vmatprep.mubr.f32.mxu0 0.0
    %1689 = vmatmul.mubr.f32.gmra.mxu0 %v1617
    %v1690 = vpop.f32.mrf.mxu0
    %v1691 = vadd.f32 %v436, %v1690
    %v1692 = vpop.f32.mrf.mxu0
    %v1693 = vadd.f32 %v440, %v1692
    %1694 = vdwg.mxu0
    %1695 = vmatprep.subr.mxu0 0.0
    %1696 = vmatpush1.msra.mxu0 %v430
    %1697 = vmatprep.subr.mxu0 0.0
    %1698 = vmatpush1.msra.mxu0 %v427
    %1699 = vmatprep.subr.mxu0 0.0
    %1700 = vmatpush1.msra.mxu0 %v424
    %1701 = vmatprep.subr.mxu0 0.0
    %1702 = vmatpush1.msra.mxu0 %v421
    %1703 = vmatprep.subr.mxu0 0.0
    %1704 = vmatpush1.msra.mxu0 %v418
    %1705 = vmatprep.subr.mxu0 0.0
    %1706 = vmatpush1.msra.mxu0 %v415
    %1707 = vmatprep.subr.mxu0 0.0
    %1708 = vmatpush1.msra.mxu0 %v412
    %1709 = vmatprep.subr.mxu0 0.0
    %1710 = vmatpush1.msra.mxu0 %v409
    %1711 = vmatprep.subr.mxu0 0.0
    %1712 = vmatpush1.msra.mxu0 %v406
    %1713 = vmatprep.subr.mxu0 0.0
    %1714 = vmatpush1.msra.mxu0 %v403
    %1715 = vmatprep.subr.mxu0 0.0
    %1716 = vmatpush1.msra.mxu0 %v400
    %1717 = vmatprep.subr.mxu0 0.0
    %1718 = vmatpush1.msra.mxu0 %v397
    %1719 = vmatprep.subr.mxu0 0.0
    %1720 = vmatpush1.msra.mxu0 %v394
    %1721 = vmatprep.subr.mxu0 0.0
    %1722 = vmatpush1.msra.mxu0 %v391
    %1723 = vmatprep.subr.mxu0 0.0
    %1724 = vmatpush1.msra.mxu0 %v388
    %1725 = vmatprep.subr.mxu0 0.0
    %1726 = vmatpush1.msra.mxu0 %v385
    %1727 = vmatprep.subr.mxu0 0.0
    %1728 = vmatpush2.msra.mxu0 0.0
    %1729 = vmatprep.subr.mxu0 0.0
    %1730 = vmatpush2.msra.mxu0 0.0
    %1731 = vmatprep.subr.mxu0 0.0
    %1732 = vmatpush2.msra.mxu0 0.0
    %1733 = vmatprep.subr.mxu0 0.0
    %1734 = vmatpush2.msra.mxu0 0.0
    %1735 = vmatprep.subr.mxu0 0.0
    %1736 = vmatpush2.msra.mxu0 0.0
    %1737 = vmatprep.subr.mxu0 0.0
    %1738 = vmatpush2.msra.mxu0 0.0
    %1739 = vmatprep.subr.mxu0 0.0
    %1740 = vmatpush2.msra.mxu0 0.0
    %1741 = vmatprep.subr.mxu0 0.0
    %1742 = vmatpush2.msra.mxu0 0.0
    %1743 = vmatprep.subr.mxu0 0.0
    %1744 = vmatpush2.msra.mxu0 0.0
    %1745 = vmatprep.subr.mxu0 0.0
    %1746 = vmatpush2.msra.mxu0 0.0
    %1747 = vmatprep.subr.mxu0 0.0
    %1748 = vmatpush2.msra.mxu0 0.0
    %1749 = vmatprep.subr.mxu0 0.0
    %1750 = vmatpush2.msra.mxu0 0.0
    %1751 = vmatprep.subr.mxu0 0.0
    %1752 = vmatpush2.msra.mxu0 0.0
    %1753 = vmatprep.subr.mxu0 0.0
    %1754 = vmatpush2.msra.mxu0 0.0
    %1755 = vmatprep.subr.mxu0 0.0
    %1756 = vmatpush2.msra.mxu0 0.0
    %1757 = vmatprep.subr.mxu0 0.0
    %1758 = vmatpush2.msra.mxu0 0.0
    %1759 = vmatprep.mubr.f32.mxu0 0.0
    %1760 = vmatmul.mubr.f32.gmra.mxu0 %v1617
    %v1761 = vpop.f32.mrf.mxu0
    %v1762 = vadd.f32 %v444, %v1761
    %v1763 = vpop.f32.mrf.mxu0
    %1764 = vdwg.mxu0
    %v1765 = vadd.f32 %v1621, %v1691
    %v1766 = vxor.u32 %v1765, 2147483648
    %v1767 = vmul.f32 %v1766, 1.442695
    %v1768 = vpow.pop %v1767
    %v1769 = vadd.f32 %v1768, 1.0
    %v1770 = vrcp.pop %v1769
    %v1771 = vmul.f32 1.0, %v1770
    %v1772 = vadd.f32 %v1622, %v1693
    %v1773 = vxor.u32 %v1772, 2147483648
    %v1774 = vmul.f32 %v1773, 1.442695
    %v1775 = vpow.pop %v1774
    %v1776 = vadd.f32 %v1775, 1.0
    %v1777 = vrcp.pop %v1776
    %v1778 = vmul.f32 1.0, %v1777
    %v1779 = vmul.f32 %v1771, %v1762
    %v1780 = vadd.f32 %v1623, %v1779
    %v1781 = vtanh.pop %v1780
    %v1782 = vsub.f32 1.0, %v1778
    %v1783 = vmul.f32 %v1782, %v1781
    %v1784 = vmul.f32 %v1778, %v1617
    %v1785 = vadd.f32 %v1783, %v1784
    %1786 = vst [vmem:[#allocation3] sm:$0xff] %v1785
    // Predicated region
    $region50: #{tpu_custom_call.1} parent=1 // pred_check
      %p1787 = pneg %p72
    $region51: #{tpu_custom_call.1} parent=1 // pred_check_branch
      %1789 = sbr.rel (%p1787) target = $region53
    $region52: #{tpu_custom_call.1} parent=1 // pred_region
      %1790 = vst [vmem:[#allocation11] sm:$0xff] %v1785
      %v1791 = vmax.f32 %v1785, 0.0
      %v1792 = vld [vmem:[#allocation9] sm:$0xff]
      %v1793 = vld [vmem:[#allocation9 + $0x8] sm:$0xff]
      %v1794 = vld [vmem:[#allocation9 + $0x10] sm:$0xff]
      %v1795 = vld [vmem:[#allocation9 + $0x18] sm:$0xff]
      %v1796 = vld [vmem:[#allocation9 + $0x20] sm:$0xff]
      %v1797 = vld [vmem:[#allocation9 + $0x28] sm:$0xff]
      %v1798 = vld [vmem:[#allocation9 + $0x30] sm:$0xff]
      %v1799 = vld [vmem:[#allocation9 + $0x38] sm:$0xff]
      %v1800 = vld [vmem:[#allocation9 + $0x40] sm:$0xff]
      %v1801 = vld [vmem:[#allocation9 + $0x48] sm:$0xff]
      %v1802 = vld [vmem:[#allocation9 + $0x50] sm:$0xff]
      %v1803 = vld [vmem:[#allocation9 + $0x58] sm:$0xff]
      %v1804 = vld [vmem:[#allocation9 + $0x60] sm:$0xff]
      %v1805 = vld [vmem:[#allocation9 + $0x68] sm:$0xff]
      %v1806 = vld [vmem:[#allocation9 + $0x70] sm:$0xff]
      %v1807 = vld [vmem:[#allocation9 + $0x78] sm:$0xff]
      %v1808 = vld [vmem:[%s7] sm:$0x1]
      %v1810 = vlaneseq
      %v1811 = vshrl.u32 %v1810, 7
      %v1812 = vsub.s32 0, %v1811
      %v1813 = vrot.slane %v1808, %v1812
      %1815 = vmatprep.subr.mxu0 0.0
      %1816 = vmatpush1.msra.mxu0 %v1807
      %1817 = vmatprep.subr.mxu0 0.0
      %1818 = vmatpush1.msra.mxu0 %v1806
      %1819 = vmatprep.subr.mxu0 0.0
      %1820 = vmatpush1.msra.mxu0 %v1805
      %1821 = vmatprep.subr.mxu0 0.0
      %1822 = vmatpush1.msra.mxu0 %v1804
      %1823 = vmatprep.subr.mxu0 0.0
      %1824 = vmatpush1.msra.mxu0 %v1803
      %1825 = vmatprep.subr.mxu0 0.0
      %1826 = vmatpush1.msra.mxu0 %v1802
      %1827 = vmatprep.subr.mxu0 0.0
      %1828 = vmatpush1.msra.mxu0 %v1801
      %1829 = vmatprep.subr.mxu0 0.0
      %1830 = vmatpush1.msra.mxu0 %v1800
      %1831 = vmatprep.subr.mxu0 0.0
      %1832 = vmatpush1.msra.mxu0 %v1799
      %1833 = vmatprep.subr.mxu0 0.0
      %1834 = vmatpush1.msra.mxu0 %v1798
      %1835 = vmatprep.subr.mxu0 0.0
      %1836 = vmatpush1.msra.mxu0 %v1797
      %1837 = vmatprep.subr.mxu0 0.0
      %1838 = vmatpush1.msra.mxu0 %v1796
      %1839 = vmatprep.subr.mxu0 0.0
      %1840 = vmatpush1.msra.mxu0 %v1795
      %1841 = vmatprep.subr.mxu0 0.0
      %1842 = vmatpush1.msra.mxu0 %v1794
      %1843 = vmatprep.subr.mxu0 0.0
      %1844 = vmatpush1.msra.mxu0 %v1793
      %1845 = vmatprep.subr.mxu0 0.0
      %1846 = vmatpush1.msra.mxu0 %v1792
      %1847 = vmatprep.subr.mxu0 0.0
      %1848 = vmatpush2.msra.mxu0 0.0
      %1849 = vmatprep.subr.mxu0 0.0
      %1850 = vmatpush2.msra.mxu0 0.0
      %1851 = vmatprep.subr.mxu0 0.0
      %1852 = vmatpush2.msra.mxu0 0.0
      %1853 = vmatprep.subr.mxu0 0.0
      %1854 = vmatpush2.msra.mxu0 0.0
      %1855 = vmatprep.subr.mxu0 0.0
      %1856 = vmatpush2.msra.mxu0 0.0
      %1857 = vmatprep.subr.mxu0 0.0
      %1858 = vmatpush2.msra.mxu0 0.0
      %1859 = vmatprep.subr.mxu0 0.0
      %1860 = vmatpush2.msra.mxu0 0.0
      %1861 = vmatprep.subr.mxu0 0.0
      %1862 = vmatpush2.msra.mxu0 0.0
      %1863 = vmatprep.subr.mxu0 0.0
      %1864 = vmatpush2.msra.mxu0 0.0
      %1865 = vmatprep.subr.mxu0 0.0
      %1866 = vmatpush2.msra.mxu0 0.0
      %1867 = vmatprep.subr.mxu0 0.0
      %1868 = vmatpush2.msra.mxu0 0.0
      %1869 = vmatprep.subr.mxu0 0.0
      %1870 = vmatpush2.msra.mxu0 0.0
      %1871 = vmatprep.subr.mxu0 0.0
      %1872 = vmatpush2.msra.mxu0 0.0
      %1873 = vmatprep.subr.mxu0 0.0
      %1874 = vmatpush2.msra.mxu0 0.0
      %1875 = vmatprep.subr.mxu0 0.0
      %1876 = vmatpush2.msra.mxu0 0.0
      %1877 = vmatprep.subr.mxu0 0.0
      %1878 = vmatpush2.msra.mxu0 0.0
      %1879 = vmatprep.mubr.f32.mxu0 0.0
      %1880 = vmatmul.mubr.f32.gmra.mxu0 %v1791
      %v1881 = vpop.f32.mrf.mxu0
      %v1882 = vadd.f32 %v1813, %v1881
      %v1883 = vpop.f32.mrf.mxu0
      %1884 = vdwg.mxu0
      %1885 = vst [vmem:[#allocation10] sm:$0xff] %v1882
    $region53: #{tpu_custom_call.1} parent=1 // pred_fallthru
      _
    // Predicated region
    $region54: #{tpu_custom_call.1} parent=1 // pred_check
      _
    $region55: #{tpu_custom_call.1} parent=1 // pred_check_branch
      %1887 = sbr.rel (0) target = $region57
    $region56: #{tpu_custom_call.1} parent=1 // pred_region
      %s1889 = ssub.s32 128, 128
      %1890 = vsyncadd [#allocation6], %s1889
      %s1892 = sshll.u32 [#allocation10], 4
      %s1893 = int_to_ptr.vmem [resolvable:$true] %s1892
      %1895 = dma.vmem_to_hbm [thread:$0]  %s1893, 128, %s8, [#allocation6]
    $region57: #{tpu_custom_call.1} parent=1 // pred_fallthru
      _
    // Predicated region
    $region58: #{tpu_custom_call.1} parent=1 // pred_check
      _
    $region59: #{tpu_custom_call.1} parent=1 // pred_check_branch
      %1897 = sbr.rel (0) target = $region61
    $region60: #{tpu_custom_call.1} parent=1 // pred_region
      %s1899 = ssub.s32 128, 128
      %1900 = vsyncadd [#allocation12], %s1899
      %s1902 = sshll.u32 [#allocation11], 4
      %s1903 = int_to_ptr.vmem [resolvable:$true] %s1902
      %1905 = dma.vmem_to_hbm [thread:$0]  %s1903, 128, %s9, [#allocation12]
    $region61: #{tpu_custom_call.1} parent=1 // pred_fallthru
      _
    // Predicated region
    $region62: #{tpu_custom_call.1} parent=1 // pred_check
      _
    $region63: #{tpu_custom_call.1} parent=1 // pred_check_branch
      %1907 = sbr.rel (0) target = $region65
    $region64: #{tpu_custom_call.1} parent=1 // pred_region
      %1908 = dma.done [#allocation6], 128
    $region65: #{tpu_custom_call.1} parent=1 // pred_fallthru
      _
    // Predicated region
    $region66: #{tpu_custom_call.1} parent=1 // pred_check
      _
    $region67: #{tpu_custom_call.1} parent=1 // pred_check_branch
      %1910 = sbr.rel (0) target = $region69
    $region68: #{tpu_custom_call.1} parent=1 // pred_region
      %1911 = dma.done [#allocation12], 128
    $region69: #{tpu_custom_call.1} parent=1 // pred_fallthru
      _
    %1912 = vsyncpa [#allocation5], 1
    %1913 = vsyncpa [#allocation8], 1
    %1914 = vsyncpa [#allocation6], 1
    %1915 = vsyncpa [#allocation12], 1

</llo_original>
